<compile_context>
chip_gen: v7x
topology: tpu7x:2x2x1
jax: 0.10.0
libtpu: 0.0.40
codegen_flags: <defaults>
</compile_context>

<pallas_src>
import jax
import jax.numpy as jnp
from jax import lax
from jax.experimental import pallas as pl
from jax.experimental.pallas import tpu as pltpu

# ----------------------------- model sizes -----------------------------------
VOCAB = 100
EMB = 32          # embedding_size
H = 32            # rnn_hidden_size (per direction); features = 2*H
CH = 32           # classifier_hidden_size
OUT = 6           # out_size
B = 2             # batch
T = 8             # sequence length

VP = 128          # vocab padded to one lane group (one-hot / table row count per direction)
GW = 8 * H        # fused gate width padded to 256 lanes: [r_f r_b z_f z_b n_f n_b zero-pad]


# ------------------------------- kernel --------------------------------------
def _rnn_classifier_kernel(
    ids_ref,       # (T*B, 2) int32: col0 = fwd token id, col1 = bwd token id + VP
    table_ref,     # (2*VP, GW) precomputed emb @ W_ih (+ folded biases); fwd rows then bwd rows
    whh_ref,       # (2H, GW)  block-diagonal hidden weights (zero-padded columns)
    bhn_ref,       # (1, 2H)   [bhh_n_fwd | bhh_n_bwd]
    wattf_ref,     # (1, H)    DotAttention Linear(2H,1) weight, fwd half
    wattb_ref,     # (1, H)    bwd half
    batt_ref,      # (1, 1)
    w1f_ref,       # (H, CH)   classifier Linear1 weight, fwd-feature rows
    w1b_ref,       # (H, CH)   bwd-feature rows
    b1_ref,        # (1, CH)
    w2_ref,        # (CH, OUT)
    b2_ref,        # (1, OUT)
    logits_ref,    # out: (B, OUT)
    attn_ref,      # out: (B, T)
):
    TB = ids_ref.shape[0]
    VP2 = table_ref.shape[0]            # 2 * VP
    Hn = bhn_ref.shape[1] // 2
    Bn, Tn = attn_ref.shape

    # ---- one-hot MXU gather of the precomputed input-gate table (both directions) ----
    ids = ids_ref[...]                                                  # (T*B, 2)
    lane = lax.broadcasted_iota(jnp.int32, (TB, VP2), 1)
    onehot = ((lane == ids[:, 0:1]).astype(jnp.float32)
              + (lane == ids[:, 1:2]).astype(jnp.float32))              # (T*B, 2*VP)
    # row s*B+b of gx = [r_f r_b z_f z_b n_f n_b pad], all input biases already folded in
    gx = jnp.dot(onehot, table_ref[...],
                 preferred_element_type=jnp.float32)                    # (T*B, GW)

    whh = whh_ref[...]                                                  # (2H, GW)
    bhn = jnp.broadcast_to(bhn_ref[...], (Bn, 2 * Hn))                  # hoisted broadcast

    # ---- fused bidirectional GRU recurrence (fully unrolled; states stay in vregs) ----
    # carry h_cat = [ h_fwd(time s) | h_bwd(time T-1-s) ]
    hf = [None] * Tn                     # hf[t]: fwd hidden at time t, (B, H)
    hb = [None] * Tn                     # hb[t]: bwd hidden at time t, (B, H)
    h_cat = jnp.zeros((Bn, 2 * Hn), jnp.float32)
    for s in range(Tn):
        gx_s = gx[s * Bn:(s + 1) * Bn, :]                               # (B, GW)
        gh = jnp.dot(h_cat, whh, preferred_element_type=jnp.float32)    # (B, GW), 1 MXU push
        rz = jax.nn.sigmoid(gx_s[:, 0:4 * Hn] + gh[:, 0:4 * Hn])
        r = rz[:, 0:2 * Hn]
        z = rz[:, 2 * Hn:4 * Hn]
        n = jnp.tanh(gx_s[:, 4 * Hn:6 * Hn] + r * (gh[:, 4 * Hn:6 * Hn] + bhn))
        h_cat = (1.0 - z) * n + z * h_cat
        hf[s] = h_cat[:, 0:Hn]                                          # fwd state @ time s
        hb[Tn - 1 - s] = h_cat[:, Hn:2 * Hn]                            # bwd state @ time T-1-s

    # ---- DotAttention pooling: scores = h @ v + b ; softmax over time ; weighted sum ----
    wattf = wattf_ref[...]                                              # (1, H)
    wattb = wattb_ref[...]                                              # (1, H)
    batt = batt_ref[...]                                                # (1, 1)
    scores = []
    for t in range(Tn):
        s_t = (jnp.sum(hf[t] * wattf, axis=1, keepdims=True)
               + jnp.sum(hb[t] * wattb, axis=1, keepdims=True) + batt)  # (B, 1)
        scores.append(s_t)

    # softmax over time, computed on the per-time (B,1) register values (no (B,T) relayout)
    m = scores[0]
    for t in range(1, Tn):
        m = jnp.maximum(m, scores[t])
    exps = [jnp.exp(scores[t] - m) for t in range(Tn)]
    denom = exps[0]
    for t in range(1, Tn):
        denom = denom + exps[t]
    inv = pl.reciprocal(denom, approx=True)                             # EUP, free slot

    feat_f = jnp.zeros((Bn, Hn), jnp.float32)
    feat_b = jnp.zeros((Bn, Hn), jnp.float32)
    for t in range(Tn):
        w_t = exps[t] * inv                                             # (B, 1)
        attn_ref[:, t:t + 1] = w_t
        feat_f = feat_f + w_t * hf[t]
        feat_b = feat_b + w_t * hb[t]

    # ---- classifier: Linear -> Dropout(eval: identity) -> ReLU -> Linear ----
    # TODO(synk): nn.Dropout(0.5) is a no-op in eval mode; training-mode dropout not implemented.
    hidden = jnp.maximum(
        jnp.dot(feat_f, w1f_ref[...], preferred_element_type=jnp.float32)
        + jnp.dot(feat_b, w1b_ref[...], preferred_element_type=jnp.float32)
        + b1_ref[...], 0.0)
    logits_ref[...] = (
        jnp.dot(hidden, w2_ref[...], preferred_element_type=jnp.float32) + b2_ref[...])


# --------------------------- parameter preparation -----------------------------
def prepare_params(p):
    """One-time re-arrangement of raw (PyTorch-layout, pre-transposed) params into the fused
    layout the kernel consumes.  Gate order per direction is (r, z, n).  Fused column layout
    is [r_f r_b z_f z_b n_f n_b zero-pad], total width GW = 8H = 256 lanes."""
    Hh = H
    hi = lax.Precision.HIGHEST
    emb = p["embedding"].astype(jnp.float32)

    def build_dir_table(wih, bih, bhh, is_bwd):
        # Fold bih (all gates) and bhh for r,z (they add linearly) into the table rows;
        # bhh_n stays separate because it sits inside the r * (...) term of the GRU n-gate.
        bias = bih + jnp.concatenate(
            [bhh[:, 0:2 * Hh], jnp.zeros((1, Hh), jnp.float32)], axis=1)
        gxt = jnp.dot(emb, wih, precision=hi) + bias                    # (VOCAB, 3H)
        tab = jnp.zeros((VP, GW), jnp.float32)
        off = Hh if is_bwd else 0
        for g in range(3):                                              # gates r, z, n
            c0 = 2 * g * Hh + off
            tab = tab.at[0:VOCAB, c0:c0 + Hh].set(gxt[:, g * Hh:(g + 1) * Hh])
        return tab

    table = jnp.concatenate(
        [build_dir_table(p["wih_f"], p["bih_f"], p["bhh_f"], False),
         build_dir_table(p["wih_b"], p["bih_b"], p["bhh_b"], True)], axis=0)   # (2*VP, GW)

    # block-diagonal hidden weights (2H, GW): rows 0:H = h_fwd, rows H:2H = h_bwd
    whh = jnp.zeros((2 * Hh, GW), jnp.float32)
    for g in range(3):
        whh = whh.at[0:Hh, 2 * g * Hh:2 * g * Hh + Hh].set(
            p["whh_f"][:, g * Hh:(g + 1) * Hh])
        whh = whh.at[Hh:2 * Hh, 2 * g * Hh + Hh:2 * (g + 1) * Hh].set(
            p["whh_b"][:, g * Hh:(g + 1) * Hh])

    bhn = jnp.concatenate([p["bhh_f"][:, 2 * Hh:3 * Hh],
                           p["bhh_b"][:, 2 * Hh:3 * Hh]], axis=1)       # (1, 2H)

    return {
        "table": table, "whh": whh, "bhn": bhn,
        "watt_f": p["watt"][:, 0:Hh], "watt_b": p["watt"][:, Hh:2 * Hh], "batt": p["batt"],
        "w1_f": p["w1"][0:Hh, :], "w1_b": p["w1"][Hh:2 * Hh, :], "b1": p["b1"],
        "w2": p["w2"], "b2": p["b2"],
    }


# ------------------------------- wrapper --------------------------------------
@jax.jit
def rnn_classifier_forward(x_tokens, fp):
    """x_tokens: (B, T) int token ids.  fp: prepare_params() output.
    Returns (logits (B, OUT), None, attn_weights (B, T)) — single pallas_call forward."""
    Bn, Tn = x_tokens.shape
    vmem = pl.BlockSpec(memory_space=pltpu.MemorySpace.VMEM)

    # step-ordered ids, row s*B+b: col0 = x[b, s]; col1 = x[b, T-1-s] + VP (bwd table rows).
    # Clamp gives defined behaviour for out-of-range ids (review correctness concern).
    x = jnp.clip(x_tokens.astype(jnp.int32), 0, VOCAB - 1)
    ids_f = x.T.reshape(Tn * Bn, 1)
    ids_b = x[:, ::-1].T.reshape(Tn * Bn, 1) + VP
    ids = jnp.concatenate([ids_f, ids_b], axis=1)                       # (T*B, 2) int32

    kernel_inputs = (
        ids, fp["table"], fp["whh"], fp["bhn"],
        fp["watt_f"], fp["watt_b"], fp["batt"],
        fp["w1_f"], fp["w1_b"], fp["b1"], fp["w2"], fp["b2"],
    )

    # TODO(synk): if batch scales beyond toy size, co-batch more rows per call (recurrence is
    # 8 serial MXU pushes regardless of B) and add a batch grid axis with
    # dimension_semantics=("parallel",) so v7x's 2 TensorCores are both used.
    logits, attn = pl.pallas_call(
        _rnn_classifier_kernel,
        out_shape=(
            jax.ShapeDtypeStruct((Bn, OUT), jnp.float32),
            jax.ShapeDtypeStruct((Bn, Tn), jnp.float32),
        ),
        in_specs=[vmem] * len(kernel_inputs),
        out_specs=(vmem, vmem),
    )(*kernel_inputs)
    return logits, None, attn


# ------------------------- pure-JAX reference (for check) ---------------------
def reference_forward(x_tokens, params):
    e_x = jnp.take(params["embedding"], x_tokens, axis=0)               # (B, T, E)

    def gru_dir(seq, wih, whh, bih, bhh):                               # seq (B, T, E)
        Hn = whh.shape[0]

        def step(h, x_t):
            gx = x_t @ wih + bih
            gh = h @ whh + bhh
            r = jax.nn.sigmoid(gx[:, :Hn] + gh[:, :Hn])
            z = jax.nn.sigmoid(gx[:, Hn:2 * Hn] + gh[:, Hn:2 * Hn])
            n = jnp.tanh(gx[:, 2 * Hn:] + r * gh[:, 2 * Hn:])
            h_new = (1.0 - z) * n + z * h
            return h_new, h_new

        h0 = jnp.zeros((seq.shape[0], Hn), jnp.float32)
        _, hs = lax.scan(step, h0, jnp.transpose(seq, (1, 0, 2)))
        return jnp.transpose(hs, (1, 0, 2))                             # (B, T, H)

    h_f = gru_dir(e_x, params["wih_f"], params["whh_f"], params["bih_f"], params["bhh_f"])
    h_b = gru_dir(e_x[:, ::-1], params["wih_b"], params["whh_b"],
                  params["bih_b"], params["bhh_b"])[:, ::-1]
    h = jnp.concatenate([h_f, h_b], axis=-1)                            # (B, T, 2H)

    scores = jnp.einsum("btf,f->bt", h, params["watt"][0]) + params["batt"][0, 0]
    w = jax.nn.softmax(scores, axis=1)
    feat = jnp.einsum("bt,btf->bf", w, h)
    hid = jnp.maximum(feat @ params["w1"] + params["b1"], 0.0)
    logits = hid @ params["w2"] + params["b2"]
    return logits, w


# --------------------------------- main ----------------------------------------
def _uniform(key, shape, k):
    return jax.random.uniform(key, shape, jnp.float32, minval=-k, maxval=k)


if __name__ == "__main__":
    key = jax.random.PRNGKey(0)
    keys = jax.random.split(key, 20)
    k = 1.0 / jnp.sqrt(jnp.float32(H))

    raw_params = {
        "embedding": jax.random.normal(keys[0], (VOCAB, EMB), jnp.float32),
        # GRU weights stored pre-transposed: (in_dim, 3H), gate order [r, z, n]
        "wih_f": _uniform(keys[1], (EMB, 3 * H), k), "whh_f": _uniform(keys[2], (H, 3 * H), k),
        "bih_f": _uniform(keys[3], (1, 3 * H), k), "bhh_f": _uniform(keys[4], (1, 3 * H), k),
        "wih_b": _uniform(keys[5], (EMB, 3 * H), k), "whh_b": _uniform(keys[6], (H, 3 * H), k),
        "bih_b": _uniform(keys[7], (1, 3 * H), k), "bhh_b": _uniform(keys[8], (1, 3 * H), k),
        # DotAttention = Linear(2H, 1)
        "watt": _uniform(keys[9], (1, 2 * H), k), "batt": _uniform(keys[10], (1, 1), k),
        # classifier Linear(2H, CH) and Linear(CH, OUT), pre-transposed
        "w1": _uniform(keys[11], (2 * H, CH), k), "b1": _uniform(keys[12], (1, CH), k),
        "w2": _uniform(keys[13], (CH, OUT), k), "b2": _uniform(keys[14], (1, OUT), k),
    }

    x_tokens = jax.random.randint(keys[15], (B, T), 0, VOCAB, dtype=jnp.int32)

    fused_params = jax.tree_util.tree_map(jax.block_until_ready, prepare_params(raw_params))

    logits, _, attn = rnn_classifier_forward(x_tokens, fused_params)
    jax.block_until_ready((logits, attn))

    assert logits.shape == (B, OUT), logits.shape
    assert attn.shape == (B, T), attn.shape

    with jax.default_matmul_precision("highest"):
        ref_logits, ref_attn = reference_forward(x_tokens, raw_params)
    assert jnp.allclose(logits, ref_logits, atol=2e-3, rtol=2e-3), (logits, ref_logits)
    assert jnp.allclose(attn, ref_attn, atol=2e-3, rtol=2e-3), (attn, ref_attn)

    print("KERNEL_OK")
</pallas_src>

<mosaic_0001>
module attributes {stable_mosaic.version = 11 : i64} {
  func.func @_rnn_classifier_kernel(%arg0: memref<16x2xi32, #tpu.memory_space<vmem>>, %arg1: memref<256x256xf32, #tpu.memory_space<vmem>>, %arg2: memref<64x256xf32, #tpu.memory_space<vmem>>, %arg3: memref<1x64xf32, #tpu.memory_space<vmem>>, %arg4: memref<1x32xf32, #tpu.memory_space<vmem>>, %arg5: memref<1x32xf32, #tpu.memory_space<vmem>>, %arg6: memref<1x1xf32, #tpu.memory_space<vmem>>, %arg7: memref<32x32xf32, #tpu.memory_space<vmem>>, %arg8: memref<32x32xf32, #tpu.memory_space<vmem>>, %arg9: memref<1x32xf32, #tpu.memory_space<vmem>>, %arg10: memref<32x6xf32, #tpu.memory_space<vmem>>, %arg11: memref<1x6xf32, #tpu.memory_space<vmem>>, %arg12: memref<2x6xf32, #tpu.memory_space<vmem>>, %arg13: memref<2x8xf32, #tpu.memory_space<vmem>>) attributes {dimension_semantics = [], scalar_prefetch = 0 : i64, scratch_operands = 0 : i64, tpu.core_type = #tpu.core_type<tc>} {
    %c0 = arith.constant 0 : index
    %c0_0 = arith.constant 0 : index
    %0 = vector.load %arg0[%c0, %c0_0] : memref<16x2xi32, #tpu.memory_space<vmem>>, vector<16x2xi32>
    %1 = tpu.iota {dimensions = array<i32: 1>} : vector<16x256xi32>
    %2 = vector.extract_strided_slice %0 {offsets = [0, 0], sizes = [16, 1], strides = [1, 1]} : vector<16x2xi32> to vector<16x1xi32>
    %3 = vector.broadcast %2 : vector<16x1xi32> to vector<16x256xi32>
    %4 = arith.cmpi eq, %1, %3 : vector<16x256xi32>
    %5 = arith.extui %4 : vector<16x256xi1> to vector<16x256xi32>
    %6 = arith.sitofp %5 : vector<16x256xi32> to vector<16x256xf32>
    %7 = vector.extract_strided_slice %0 {offsets = [0, 1], sizes = [16, 1], strides = [1, 1]} : vector<16x2xi32> to vector<16x1xi32>
    %8 = vector.broadcast %7 : vector<16x1xi32> to vector<16x256xi32>
    %9 = arith.cmpi eq, %1, %8 : vector<16x256xi32>
    %10 = arith.extui %9 : vector<16x256xi1> to vector<16x256xi32>
    %11 = arith.sitofp %10 : vector<16x256xi32> to vector<16x256xf32>
    %12 = arith.addf %6, %11 : vector<16x256xf32>
    %c0_1 = arith.constant 0 : index
    %c0_2 = arith.constant 0 : index
    %13 = vector.load %arg1[%c0_1, %c0_2] : memref<256x256xf32, #tpu.memory_space<vmem>>, vector<256x256xf32>
    %cst = arith.constant dense<0.000000e+00> : vector<16x256xf32>
    %14 = tpu.matmul %12, %13, %cst {dimension_numbers = #tpu.dot_dimension_numbers<[1], [0], [0], [1], [0, 0, 1, 1], [], []>} : vector<16x256xf32>, vector<256x256xf32>, vector<16x256xf32> -> vector<16x256xf32>
    %c0_3 = arith.constant 0 : index
    %c0_4 = arith.constant 0 : index
    %15 = vector.load %arg2[%c0_3, %c0_4] : memref<64x256xf32, #tpu.memory_space<vmem>>, vector<64x256xf32>
    %c0_5 = arith.constant 0 : index
    %c0_6 = arith.constant 0 : index
    %16 = vector.load %arg3[%c0_5, %c0_6] : memref<1x64xf32, #tpu.memory_space<vmem>>, vector<1x64xf32>
    %17 = vector.shape_cast %16 : vector<1x64xf32> to vector<1x64xf32>
    %18 = vector.broadcast %17 : vector<1x64xf32> to vector<2x64xf32>
    %cst_7 = arith.constant 0.000000e+00 : f32
    %19 = vector.broadcast %cst_7 : f32 to vector<2x64xf32>
    %20 = vector.extract_strided_slice %14 {offsets = [0, 0], sizes = [2, 256], strides = [1, 1]} : vector<16x256xf32> to vector<2x256xf32>
    %cst_8 = arith.constant dense<0.000000e+00> : vector<2x256xf32>
    %21 = tpu.matmul %19, %15, %cst_8 {dimension_numbers = #tpu.dot_dimension_numbers<[1], [0], [0], [1], [0, 0, 1, 1], [], []>} : vector<2x64xf32>, vector<64x256xf32>, vector<2x256xf32> -> vector<2x256xf32>
    %22 = vector.extract_strided_slice %20 {offsets = [0, 0], sizes = [2, 128], strides = [1, 1]} : vector<2x256xf32> to vector<2x128xf32>
    %23 = vector.extract_strided_slice %21 {offsets = [0, 0], sizes = [2, 128], strides = [1, 1]} : vector<2x256xf32> to vector<2x128xf32>
    %24 = arith.addf %22, %23 : vector<2x128xf32>
    %25 = arith.negf %24 : vector<2x128xf32>
    %26 = math.exp %25 : vector<2x128xf32>
    %cst_9 = arith.constant 1.000000e+00 : f32
    %27 = vector.broadcast %cst_9 : f32 to vector<2x128xf32>
    %28 = arith.addf %27, %26 : vector<2x128xf32>
    %29 = arith.divf %27, %28 : vector<2x128xf32>
    %30 = vector.extract_strided_slice %29 {offsets = [0, 0], sizes = [2, 64], strides = [1, 1]} : vector<2x128xf32> to vector<2x64xf32>
    %31 = vector.extract_strided_slice %29 {offsets = [0, 64], sizes = [2, 64], strides = [1, 1]} : vector<2x128xf32> to vector<2x64xf32>
    %32 = vector.extract_strided_slice %20 {offsets = [0, 128], sizes = [2, 64], strides = [1, 1]} : vector<2x256xf32> to vector<2x64xf32>
    %33 = vector.extract_strided_slice %21 {offsets = [0, 128], sizes = [2, 64], strides = [1, 1]} : vector<2x256xf32> to vector<2x64xf32>
    %34 = arith.addf %33, %18 : vector<2x64xf32>
    %35 = arith.mulf %30, %34 : vector<2x64xf32>
    %36 = arith.addf %32, %35 : vector<2x64xf32>
    %37 = math.tanh %36 : vector<2x64xf32>
    %cst_10 = arith.constant 1.000000e+00 : f32
    %38 = vector.broadcast %cst_10 : f32 to vector<2x64xf32>
    %39 = arith.subf %38, %31 : vector<2x64xf32>
    %40 = arith.mulf %39, %37 : vector<2x64xf32>
    %41 = arith.mulf %31, %19 : vector<2x64xf32>
    %42 = arith.addf %40, %41 : vector<2x64xf32>
    %43 = vector.extract_strided_slice %42 {offsets = [0, 0], sizes = [2, 32], strides = [1, 1]} : vector<2x64xf32> to vector<2x32xf32>
    %44 = vector.extract_strided_slice %42 {offsets = [0, 32], sizes = [2, 32], strides = [1, 1]} : vector<2x64xf32> to vector<2x32xf32>
    %45 = vector.extract_strided_slice %14 {offsets = [2, 0], sizes = [2, 256], strides = [1, 1]} : vector<16x256xf32> to vector<2x256xf32>
    %cst_11 = arith.constant dense<0.000000e+00> : vector<2x256xf32>
    %46 = tpu.matmul %42, %15, %cst_11 {dimension_numbers = #tpu.dot_dimension_numbers<[1], [0], [0], [1], [0, 0, 1, 1], [], []>} : vector<2x64xf32>, vector<64x256xf32>, vector<2x256xf32> -> vector<2x256xf32>
    %47 = vector.extract_strided_slice %45 {offsets = [0, 0], sizes = [2, 128], strides = [1, 1]} : vector<2x256xf32> to vector<2x128xf32>
    %48 = vector.extract_strided_slice %46 {offsets = [0, 0], sizes = [2, 128], strides = [1, 1]} : vector<2x256xf32> to vector<2x128xf32>
    %49 = arith.addf %47, %48 : vector<2x128xf32>
    %50 = arith.negf %49 : vector<2x128xf32>
    %51 = math.exp %50 : vector<2x128xf32>
    %cst_12 = arith.constant 1.000000e+00 : f32
    %52 = vector.broadcast %cst_12 : f32 to vector<2x128xf32>
    %53 = arith.addf %52, %51 : vector<2x128xf32>
    %54 = arith.divf %52, %53 : vector<2x128xf32>
    %55 = vector.extract_strided_slice %54 {offsets = [0, 0], sizes = [2, 64], strides = [1, 1]} : vector<2x128xf32> to vector<2x64xf32>
    %56 = vector.extract_strided_slice %54 {offsets = [0, 64], sizes = [2, 64], strides = [1, 1]} : vector<2x128xf32> to vector<2x64xf32>
    %57 = vector.extract_strided_slice %45 {offsets = [0, 128], sizes = [2, 64], strides = [1, 1]} : vector<2x256xf32> to vector<2x64xf32>
    %58 = vector.extract_strided_slice %46 {offsets = [0, 128], sizes = [2, 64], strides = [1, 1]} : vector<2x256xf32> to vector<2x64xf32>
    %59 = arith.addf %58, %18 : vector<2x64xf32>
    %60 = arith.mulf %55, %59 : vector<2x64xf32>
    %61 = arith.addf %57, %60 : vector<2x64xf32>
    %62 = math.tanh %61 : vector<2x64xf32>
    %cst_13 = arith.constant 1.000000e+00 : f32
    %63 = vector.broadcast %cst_13 : f32 to vector<2x64xf32>
    %64 = arith.subf %63, %56 : vector<2x64xf32>
    %65 = arith.mulf %64, %62 : vector<2x64xf32>
    %66 = arith.mulf %56, %42 : vector<2x64xf32>
    %67 = arith.addf %65, %66 : vector<2x64xf32>
    %68 = vector.extract_strided_slice %67 {offsets = [0, 0], sizes = [2, 32], strides = [1, 1]} : vector<2x64xf32> to vector<2x32xf32>
    %69 = vector.extract_strided_slice %67 {offsets = [0, 32], sizes = [2, 32], strides = [1, 1]} : vector<2x64xf32> to vector<2x32xf32>
    %70 = vector.extract_strided_slice %14 {offsets = [4, 0], sizes = [2, 256], strides = [1, 1]} : vector<16x256xf32> to vector<2x256xf32>
    %cst_14 = arith.constant dense<0.000000e+00> : vector<2x256xf32>
    %71 = tpu.matmul %67, %15, %cst_14 {dimension_numbers = #tpu.dot_dimension_numbers<[1], [0], [0], [1], [0, 0, 1, 1], [], []>} : vector<2x64xf32>, vector<64x256xf32>, vector<2x256xf32> -> vector<2x256xf32>
    %72 = vector.extract_strided_slice %70 {offsets = [0, 0], sizes = [2, 128], strides = [1, 1]} : vector<2x256xf32> to vector<2x128xf32>
    %73 = vector.extract_strided_slice %71 {offsets = [0, 0], sizes = [2, 128], strides = [1, 1]} : vector<2x256xf32> to vector<2x128xf32>
    %74 = arith.addf %72, %73 : vector<2x128xf32>
    %75 = arith.negf %74 : vector<2x128xf32>
    %76 = math.exp %75 : vector<2x128xf32>
    %cst_15 = arith.constant 1.000000e+00 : f32
    %77 = vector.broadcast %cst_15 : f32 to vector<2x128xf32>
    %78 = arith.addf %77, %76 : vector<2x128xf32>
    %79 = arith.divf %77, %78 : vector<2x128xf32>
    %80 = vector.extract_strided_slice %79 {offsets = [0, 0], sizes = [2, 64], strides = [1, 1]} : vector<2x128xf32> to vector<2x64xf32>
    %81 = vector.extract_strided_slice %79 {offsets = [0, 64], sizes = [2, 64], strides = [1, 1]} : vector<2x128xf32> to vector<2x64xf32>
    %82 = vector.extract_strided_slice %70 {offsets = [0, 128], sizes = [2, 64], strides = [1, 1]} : vector<2x256xf32> to vector<2x64xf32>
    %83 = vector.extract_strided_slice %71 {offsets = [0, 128], sizes = [2, 64], strides = [1, 1]} : vector<2x256xf32> to vector<2x64xf32>
    %84 = arith.addf %83, %18 : vector<2x64xf32>
    %85 = arith.mulf %80, %84 : vector<2x64xf32>
    %86 = arith.addf %82, %85 : vector<2x64xf32>
    %87 = math.tanh %86 : vector<2x64xf32>
    %cst_16 = arith.constant 1.000000e+00 : f32
    %88 = vector.broadcast %cst_16 : f32 to vector<2x64xf32>
    %89 = arith.subf %88, %81 : vector<2x64xf32>
    %90 = arith.mulf %89, %87 : vector<2x64xf32>
    %91 = arith.mulf %81, %67 : vector<2x64xf32>
    %92 = arith.addf %90, %91 : vector<2x64xf32>
    %93 = vector.extract_strided_slice %92 {offsets = [0, 0], sizes = [2, 32], strides = [1, 1]} : vector<2x64xf32> to vector<2x32xf32>
    %94 = vector.extract_strided_slice %92 {offsets = [0, 32], sizes = [2, 32], strides = [1, 1]} : vector<2x64xf32> to vector<2x32xf32>
    %95 = vector.extract_strided_slice %14 {offsets = [6, 0], sizes = [2, 256], strides = [1, 1]} : vector<16x256xf32> to vector<2x256xf32>
    %cst_17 = arith.constant dense<0.000000e+00> : vector<2x256xf32>
    %96 = tpu.matmul %92, %15, %cst_17 {dimension_numbers = #tpu.dot_dimension_numbers<[1], [0], [0], [1], [0, 0, 1, 1], [], []>} : vector<2x64xf32>, vector<64x256xf32>, vector<2x256xf32> -> vector<2x256xf32>
    %97 = vector.extract_strided_slice %95 {offsets = [0, 0], sizes = [2, 128], strides = [1, 1]} : vector<2x256xf32> to vector<2x128xf32>
    %98 = vector.extract_strided_slice %96 {offsets = [0, 0], sizes = [2, 128], strides = [1, 1]} : vector<2x256xf32> to vector<2x128xf32>
    %99 = arith.addf %97, %98 : vector<2x128xf32>
    %100 = arith.negf %99 : vector<2x128xf32>
    %101 = math.exp %100 : vector<2x128xf32>
    %cst_18 = arith.constant 1.000000e+00 : f32
    %102 = vector.broadcast %cst_18 : f32 to vector<2x128xf32>
    %103 = arith.addf %102, %101 : vector<2x128xf32>
    %104 = arith.divf %102, %103 : vector<2x128xf32>
    %105 = vector.extract_strided_slice %104 {offsets = [0, 0], sizes = [2, 64], strides = [1, 1]} : vector<2x128xf32> to vector<2x64xf32>
    %106 = vector.extract_strided_slice %104 {offsets = [0, 64], sizes = [2, 64], strides = [1, 1]} : vector<2x128xf32> to vector<2x64xf32>
    %107 = vector.extract_strided_slice %95 {offsets = [0, 128], sizes = [2, 64], strides = [1, 1]} : vector<2x256xf32> to vector<2x64xf32>
    %108 = vector.extract_strided_slice %96 {offsets = [0, 128], sizes = [2, 64], strides = [1, 1]} : vector<2x256xf32> to vector<2x64xf32>
    %109 = arith.addf %108, %18 : vector<2x64xf32>
    %110 = arith.mulf %105, %109 : vector<2x64xf32>
    %111 = arith.addf %107, %110 : vector<2x64xf32>
    %112 = math.tanh %111 : vector<2x64xf32>
    %cst_19 = arith.constant 1.000000e+00 : f32
    %113 = vector.broadcast %cst_19 : f32 to vector<2x64xf32>
    %114 = arith.subf %113, %106 : vector<2x64xf32>
    %115 = arith.mulf %114, %112 : vector<2x64xf32>
    %116 = arith.mulf %106, %92 : vector<2x64xf32>
    %117 = arith.addf %115, %116 : vector<2x64xf32>
    %118 = vector.extract_strided_slice %117 {offsets = [0, 0], sizes = [2, 32], strides = [1, 1]} : vector<2x64xf32> to vector<2x32xf32>
    %119 = vector.extract_strided_slice %117 {offsets = [0, 32], sizes = [2, 32], strides = [1, 1]} : vector<2x64xf32> to vector<2x32xf32>
    %120 = vector.extract_strided_slice %14 {offsets = [8, 0], sizes = [2, 256], strides = [1, 1]} : vector<16x256xf32> to vector<2x256xf32>
    %cst_20 = arith.constant dense<0.000000e+00> : vector<2x256xf32>
    %121 = tpu.matmul %117, %15, %cst_20 {dimension_numbers = #tpu.dot_dimension_numbers<[1], [0], [0], [1], [0, 0, 1, 1], [], []>} : vector<2x64xf32>, vector<64x256xf32>, vector<2x256xf32> -> vector<2x256xf32>
    %122 = vector.extract_strided_slice %120 {offsets = [0, 0], sizes = [2, 128], strides = [1, 1]} : vector<2x256xf32> to vector<2x128xf32>
    %123 = vector.extract_strided_slice %121 {offsets = [0, 0], sizes = [2, 128], strides = [1, 1]} : vector<2x256xf32> to vector<2x128xf32>
    %124 = arith.addf %122, %123 : vector<2x128xf32>
    %125 = arith.negf %124 : vector<2x128xf32>
    %126 = math.exp %125 : vector<2x128xf32>
    %cst_21 = arith.constant 1.000000e+00 : f32
    %127 = vector.broadcast %cst_21 : f32 to vector<2x128xf32>
    %128 = arith.addf %127, %126 : vector<2x128xf32>
    %129 = arith.divf %127, %128 : vector<2x128xf32>
    %130 = vector.extract_strided_slice %129 {offsets = [0, 0], sizes = [2, 64], strides = [1, 1]} : vector<2x128xf32> to vector<2x64xf32>
    %131 = vector.extract_strided_slice %129 {offsets = [0, 64], sizes = [2, 64], strides = [1, 1]} : vector<2x128xf32> to vector<2x64xf32>
    %132 = vector.extract_strided_slice %120 {offsets = [0, 128], sizes = [2, 64], strides = [1, 1]} : vector<2x256xf32> to vector<2x64xf32>
    %133 = vector.extract_strided_slice %121 {offsets = [0, 128], sizes = [2, 64], strides = [1, 1]} : vector<2x256xf32> to vector<2x64xf32>
    %134 = arith.addf %133, %18 : vector<2x64xf32>
    %135 = arith.mulf %130, %134 : vector<2x64xf32>
    %136 = arith.addf %132, %135 : vector<2x64xf32>
    %137 = math.tanh %136 : vector<2x64xf32>
    %cst_22 = arith.constant 1.000000e+00 : f32
    %138 = vector.broadcast %cst_22 : f32 to vector<2x64xf32>
    %139 = arith.subf %138, %131 : vector<2x64xf32>
    %140 = arith.mulf %139, %137 : vector<2x64xf32>
    %141 = arith.mulf %131, %117 : vector<2x64xf32>
    %142 = arith.addf %140, %141 : vector<2x64xf32>
    %143 = vector.extract_strided_slice %142 {offsets = [0, 0], sizes = [2, 32], strides = [1, 1]} : vector<2x64xf32> to vector<2x32xf32>
    %144 = vector.extract_strided_slice %142 {offsets = [0, 32], sizes = [2, 32], strides = [1, 1]} : vector<2x64xf32> to vector<2x32xf32>
    %145 = vector.extract_strided_slice %14 {offsets = [10, 0], sizes = [2, 256], strides = [1, 1]} : vector<16x256xf32> to vector<2x256xf32>
    %cst_23 = arith.constant dense<0.000000e+00> : vector<2x256xf32>
    %146 = tpu.matmul %142, %15, %cst_23 {dimension_numbers = #tpu.dot_dimension_numbers<[1], [0], [0], [1], [0, 0, 1, 1], [], []>} : vector<2x64xf32>, vector<64x256xf32>, vector<2x256xf32> -> vector<2x256xf32>
    %147 = vector.extract_strided_slice %145 {offsets = [0, 0], sizes = [2, 128], strides = [1, 1]} : vector<2x256xf32> to vector<2x128xf32>
    %148 = vector.extract_strided_slice %146 {offsets = [0, 0], sizes = [2, 128], strides = [1, 1]} : vector<2x256xf32> to vector<2x128xf32>
    %149 = arith.addf %147, %148 : vector<2x128xf32>
    %150 = arith.negf %149 : vector<2x128xf32>
    %151 = math.exp %150 : vector<2x128xf32>
    %cst_24 = arith.constant 1.000000e+00 : f32
    %152 = vector.broadcast %cst_24 : f32 to vector<2x128xf32>
    %153 = arith.addf %152, %151 : vector<2x128xf32>
    %154 = arith.divf %152, %153 : vector<2x128xf32>
    %155 = vector.extract_strided_slice %154 {offsets = [0, 0], sizes = [2, 64], strides = [1, 1]} : vector<2x128xf32> to vector<2x64xf32>
    %156 = vector.extract_strided_slice %154 {offsets = [0, 64], sizes = [2, 64], strides = [1, 1]} : vector<2x128xf32> to vector<2x64xf32>
    %157 = vector.extract_strided_slice %145 {offsets = [0, 128], sizes = [2, 64], strides = [1, 1]} : vector<2x256xf32> to vector<2x64xf32>
    %158 = vector.extract_strided_slice %146 {offsets = [0, 128], sizes = [2, 64], strides = [1, 1]} : vector<2x256xf32> to vector<2x64xf32>
    %159 = arith.addf %158, %18 : vector<2x64xf32>
    %160 = arith.mulf %155, %159 : vector<2x64xf32>
    %161 = arith.addf %157, %160 : vector<2x64xf32>
    %162 = math.tanh %161 : vector<2x64xf32>
    %cst_25 = arith.constant 1.000000e+00 : f32
    %163 = vector.broadcast %cst_25 : f32 to vector<2x64xf32>
    %164 = arith.subf %163, %156 : vector<2x64xf32>
    %165 = arith.mulf %164, %162 : vector<2x64xf32>
    %166 = arith.mulf %156, %142 : vector<2x64xf32>
    %167 = arith.addf %165, %166 : vector<2x64xf32>
    %168 = vector.extract_strided_slice %167 {offsets = [0, 0], sizes = [2, 32], strides = [1, 1]} : vector<2x64xf32> to vector<2x32xf32>
    %169 = vector.extract_strided_slice %167 {offsets = [0, 32], sizes = [2, 32], strides = [1, 1]} : vector<2x64xf32> to vector<2x32xf32>
    %170 = vector.extract_strided_slice %14 {offsets = [12, 0], sizes = [2, 256], strides = [1, 1]} : vector<16x256xf32> to vector<2x256xf32>
    %cst_26 = arith.constant dense<0.000000e+00> : vector<2x256xf32>
    %171 = tpu.matmul %167, %15, %cst_26 {dimension_numbers = #tpu.dot_dimension_numbers<[1], [0], [0], [1], [0, 0, 1, 1], [], []>} : vector<2x64xf32>, vector<64x256xf32>, vector<2x256xf32> -> vector<2x256xf32>
    %172 = vector.extract_strided_slice %170 {offsets = [0, 0], sizes = [2, 128], strides = [1, 1]} : vector<2x256xf32> to vector<2x128xf32>
    %173 = vector.extract_strided_slice %171 {offsets = [0, 0], sizes = [2, 128], strides = [1, 1]} : vector<2x256xf32> to vector<2x128xf32>
    %174 = arith.addf %172, %173 : vector<2x128xf32>
    %175 = arith.negf %174 : vector<2x128xf32>
    %176 = math.exp %175 : vector<2x128xf32>
    %cst_27 = arith.constant 1.000000e+00 : f32
    %177 = vector.broadcast %cst_27 : f32 to vector<2x128xf32>
    %178 = arith.addf %177, %176 : vector<2x128xf32>
    %179 = arith.divf %177, %178 : vector<2x128xf32>
    %180 = vector.extract_strided_slice %179 {offsets = [0, 0], sizes = [2, 64], strides = [1, 1]} : vector<2x128xf32> to vector<2x64xf32>
    %181 = vector.extract_strided_slice %179 {offsets = [0, 64], sizes = [2, 64], strides = [1, 1]} : vector<2x128xf32> to vector<2x64xf32>
    %182 = vector.extract_strided_slice %170 {offsets = [0, 128], sizes = [2, 64], strides = [1, 1]} : vector<2x256xf32> to vector<2x64xf32>
    %183 = vector.extract_strided_slice %171 {offsets = [0, 128], sizes = [2, 64], strides = [1, 1]} : vector<2x256xf32> to vector<2x64xf32>
    %184 = arith.addf %183, %18 : vector<2x64xf32>
    %185 = arith.mulf %180, %184 : vector<2x64xf32>
    %186 = arith.addf %182, %185 : vector<2x64xf32>
    %187 = math.tanh %186 : vector<2x64xf32>
    %cst_28 = arith.constant 1.000000e+00 : f32
    %188 = vector.broadcast %cst_28 : f32 to vector<2x64xf32>
    %189 = arith.subf %188, %181 : vector<2x64xf32>
    %190 = arith.mulf %189, %187 : vector<2x64xf32>
    %191 = arith.mulf %181, %167 : vector<2x64xf32>
    %192 = arith.addf %190, %191 : vector<2x64xf32>
    %193 = vector.extract_strided_slice %192 {offsets = [0, 0], sizes = [2, 32], strides = [1, 1]} : vector<2x64xf32> to vector<2x32xf32>
    %194 = vector.extract_strided_slice %192 {offsets = [0, 32], sizes = [2, 32], strides = [1, 1]} : vector<2x64xf32> to vector<2x32xf32>
    %195 = vector.extract_strided_slice %14 {offsets = [14, 0], sizes = [2, 256], strides = [1, 1]} : vector<16x256xf32> to vector<2x256xf32>
    %cst_29 = arith.constant dense<0.000000e+00> : vector<2x256xf32>
    %196 = tpu.matmul %192, %15, %cst_29 {dimension_numbers = #tpu.dot_dimension_numbers<[1], [0], [0], [1], [0, 0, 1, 1], [], []>} : vector<2x64xf32>, vector<64x256xf32>, vector<2x256xf32> -> vector<2x256xf32>
    %197 = vector.extract_strided_slice %195 {offsets = [0, 0], sizes = [2, 128], strides = [1, 1]} : vector<2x256xf32> to vector<2x128xf32>
    %198 = vector.extract_strided_slice %196 {offsets = [0, 0], sizes = [2, 128], strides = [1, 1]} : vector<2x256xf32> to vector<2x128xf32>
    %199 = arith.addf %197, %198 : vector<2x128xf32>
    %200 = arith.negf %199 : vector<2x128xf32>
    %201 = math.exp %200 : vector<2x128xf32>
    %cst_30 = arith.constant 1.000000e+00 : f32
    %202 = vector.broadcast %cst_30 : f32 to vector<2x128xf32>
    %203 = arith.addf %202, %201 : vector<2x128xf32>
    %204 = arith.divf %202, %203 : vector<2x128xf32>
    %205 = vector.extract_strided_slice %204 {offsets = [0, 0], sizes = [2, 64], strides = [1, 1]} : vector<2x128xf32> to vector<2x64xf32>
    %206 = vector.extract_strided_slice %204 {offsets = [0, 64], sizes = [2, 64], strides = [1, 1]} : vector<2x128xf32> to vector<2x64xf32>
    %207 = vector.extract_strided_slice %195 {offsets = [0, 128], sizes = [2, 64], strides = [1, 1]} : vector<2x256xf32> to vector<2x64xf32>
    %208 = vector.extract_strided_slice %196 {offsets = [0, 128], sizes = [2, 64], strides = [1, 1]} : vector<2x256xf32> to vector<2x64xf32>
    %209 = arith.addf %208, %18 : vector<2x64xf32>
    %210 = arith.mulf %205, %209 : vector<2x64xf32>
    %211 = arith.addf %207, %210 : vector<2x64xf32>
    %212 = math.tanh %211 : vector<2x64xf32>
    %cst_31 = arith.constant 1.000000e+00 : f32
    %213 = vector.broadcast %cst_31 : f32 to vector<2x64xf32>
    %214 = arith.subf %213, %206 : vector<2x64xf32>
    %215 = arith.mulf %214, %212 : vector<2x64xf32>
    %216 = arith.mulf %206, %192 : vector<2x64xf32>
    %217 = arith.addf %215, %216 : vector<2x64xf32>
    %218 = vector.extract_strided_slice %217 {offsets = [0, 0], sizes = [2, 32], strides = [1, 1]} : vector<2x64xf32> to vector<2x32xf32>
    %219 = vector.extract_strided_slice %217 {offsets = [0, 32], sizes = [2, 32], strides = [1, 1]} : vector<2x64xf32> to vector<2x32xf32>
    %c0_32 = arith.constant 0 : index
    %c0_33 = arith.constant 0 : index
    %220 = vector.load %arg4[%c0_32, %c0_33] : memref<1x32xf32, #tpu.memory_space<vmem>>, vector<1x32xf32>
    %c0_34 = arith.constant 0 : index
    %c0_35 = arith.constant 0 : index
    %221 = vector.load %arg5[%c0_34, %c0_35] : memref<1x32xf32, #tpu.memory_space<vmem>>, vector<1x32xf32>
    %c0_36 = arith.constant 0 : index
    %c0_37 = arith.constant 0 : index
    %222 = vector.load %arg6[%c0_36, %c0_37] : memref<1x1xf32, #tpu.memory_space<vmem>>, vector<1x1xf32>
    %223 = vector.broadcast %220 : vector<1x32xf32> to vector<2x32xf32>
    %224 = arith.mulf %43, %223 : vector<2x32xf32>
    %cst_38 = arith.constant dense<0.000000e+00> : vector<2xf32>
    %225 = vector.multi_reduction <add>, %224, %cst_38 [1] : vector<2x32xf32> to vector<2xf32>
    %226 = vector.shape_cast %225 : vector<2xf32> to vector<2x1xf32>
    %227 = vector.broadcast %221 : vector<1x32xf32> to vector<2x32xf32>
    %228 = arith.mulf %219, %227 : vector<2x32xf32>
    %cst_39 = arith.constant dense<0.000000e+00> : vector<2xf32>
    %229 = vector.multi_reduction <add>, %228, %cst_39 [1] : vector<2x32xf32> to vector<2xf32>
    %230 = vector.shape_cast %229 : vector<2xf32> to vector<2x1xf32>
    %231 = arith.addf %226, %230 : vector<2x1xf32>
    %232 = vector.broadcast %222 : vector<1x1xf32> to vector<2x1xf32>
    %233 = arith.addf %231, %232 : vector<2x1xf32>
    %234 = vector.broadcast %220 : vector<1x32xf32> to vector<2x32xf32>
    %235 = arith.mulf %68, %234 : vector<2x32xf32>
    %cst_40 = arith.constant dense<0.000000e+00> : vector<2xf32>
    %236 = vector.multi_reduction <add>, %235, %cst_40 [1] : vector<2x32xf32> to vector<2xf32>
    %237 = vector.shape_cast %236 : vector<2xf32> to vector<2x1xf32>
    %238 = vector.broadcast %221 : vector<1x32xf32> to vector<2x32xf32>
    %239 = arith.mulf %194, %238 : vector<2x32xf32>
    %cst_41 = arith.constant dense<0.000000e+00> : vector<2xf32>
    %240 = vector.multi_reduction <add>, %239, %cst_41 [1] : vector<2x32xf32> to vector<2xf32>
    %241 = vector.shape_cast %240 : vector<2xf32> to vector<2x1xf32>
    %242 = arith.addf %237, %241 : vector<2x1xf32>
    %243 = vector.broadcast %222 : vector<1x1xf32> to vector<2x1xf32>
    %244 = arith.addf %242, %243 : vector<2x1xf32>
    %245 = vector.broadcast %220 : vector<1x32xf32> to vector<2x32xf32>
    %246 = arith.mulf %93, %245 : vector<2x32xf32>
    %cst_42 = arith.constant dense<0.000000e+00> : vector<2xf32>
    %247 = vector.multi_reduction <add>, %246, %cst_42 [1] : vector<2x32xf32> to vector<2xf32>
    %248 = vector.shape_cast %247 : vector<2xf32> to vector<2x1xf32>
    %249 = vector.broadcast %221 : vector<1x32xf32> to vector<2x32xf32>
    %250 = arith.mulf %169, %249 : vector<2x32xf32>
    %cst_43 = arith.constant dense<0.000000e+00> : vector<2xf32>
    %251 = vector.multi_reduction <add>, %250, %cst_43 [1] : vector<2x32xf32> to vector<2xf32>
    %252 = vector.shape_cast %251 : vector<2xf32> to vector<2x1xf32>
    %253 = arith.addf %248, %252 : vector<2x1xf32>
    %254 = vector.broadcast %222 : vector<1x1xf32> to vector<2x1xf32>
    %255 = arith.addf %253, %254 : vector<2x1xf32>
    %256 = vector.broadcast %220 : vector<1x32xf32> to vector<2x32xf32>
    %257 = arith.mulf %118, %256 : vector<2x32xf32>
    %cst_44 = arith.constant dense<0.000000e+00> : vector<2xf32>
    %258 = vector.multi_reduction <add>, %257, %cst_44 [1] : vector<2x32xf32> to vector<2xf32>
    %259 = vector.shape_cast %258 : vector<2xf32> to vector<2x1xf32>
    %260 = vector.broadcast %221 : vector<1x32xf32> to vector<2x32xf32>
    %261 = arith.mulf %144, %260 : vector<2x32xf32>
    %cst_45 = arith.constant dense<0.000000e+00> : vector<2xf32>
    %262 = vector.multi_reduction <add>, %261, %cst_45 [1] : vector<2x32xf32> to vector<2xf32>
    %263 = vector.shape_cast %262 : vector<2xf32> to vector<2x1xf32>
    %264 = arith.addf %259, %263 : vector<2x1xf32>
    %265 = vector.broadcast %222 : vector<1x1xf32> to vector<2x1xf32>
    %266 = arith.addf %264, %265 : vector<2x1xf32>
    %267 = vector.broadcast %220 : vector<1x32xf32> to vector<2x32xf32>
    %268 = arith.mulf %143, %267 : vector<2x32xf32>
    %cst_46 = arith.constant dense<0.000000e+00> : vector<2xf32>
    %269 = vector.multi_reduction <add>, %268, %cst_46 [1] : vector<2x32xf32> to vector<2xf32>
    %270 = vector.shape_cast %269 : vector<2xf32> to vector<2x1xf32>
    %271 = vector.broadcast %221 : vector<1x32xf32> to vector<2x32xf32>
    %272 = arith.mulf %119, %271 : vector<2x32xf32>
    %cst_47 = arith.constant dense<0.000000e+00> : vector<2xf32>
    %273 = vector.multi_reduction <add>, %272, %cst_47 [1] : vector<2x32xf32> to vector<2xf32>
    %274 = vector.shape_cast %273 : vector<2xf32> to vector<2x1xf32>
    %275 = arith.addf %270, %274 : vector<2x1xf32>
    %276 = vector.broadcast %222 : vector<1x1xf32> to vector<2x1xf32>
    %277 = arith.addf %275, %276 : vector<2x1xf32>
    %278 = vector.broadcast %220 : vector<1x32xf32> to vector<2x32xf32>
    %279 = arith.mulf %168, %278 : vector<2x32xf32>
    %cst_48 = arith.constant dense<0.000000e+00> : vector<2xf32>
    %280 = vector.multi_reduction <add>, %279, %cst_48 [1] : vector<2x32xf32> to vector<2xf32>
    %281 = vector.shape_cast %280 : vector<2xf32> to vector<2x1xf32>
    %282 = vector.broadcast %221 : vector<1x32xf32> to vector<2x32xf32>
    %283 = arith.mulf %94, %282 : vector<2x32xf32>
    %cst_49 = arith.constant dense<0.000000e+00> : vector<2xf32>
    %284 = vector.multi_reduction <add>, %283, %cst_49 [1] : vector<2x32xf32> to vector<2xf32>
    %285 = vector.shape_cast %284 : vector<2xf32> to vector<2x1xf32>
    %286 = arith.addf %281, %285 : vector<2x1xf32>
    %287 = vector.broadcast %222 : vector<1x1xf32> to vector<2x1xf32>
    %288 = arith.addf %286, %287 : vector<2x1xf32>
    %289 = vector.broadcast %220 : vector<1x32xf32> to vector<2x32xf32>
    %290 = arith.mulf %193, %289 : vector<2x32xf32>
    %cst_50 = arith.constant dense<0.000000e+00> : vector<2xf32>
    %291 = vector.multi_reduction <add>, %290, %cst_50 [1] : vector<2x32xf32> to vector<2xf32>
    %292 = vector.shape_cast %291 : vector<2xf32> to vector<2x1xf32>
    %293 = vector.broadcast %221 : vector<1x32xf32> to vector<2x32xf32>
    %294 = arith.mulf %69, %293 : vector<2x32xf32>
    %cst_51 = arith.constant dense<0.000000e+00> : vector<2xf32>
    %295 = vector.multi_reduction <add>, %294, %cst_51 [1] : vector<2x32xf32> to vector<2xf32>
    %296 = vector.shape_cast %295 : vector<2xf32> to vector<2x1xf32>
    %297 = arith.addf %292, %296 : vector<2x1xf32>
    %298 = vector.broadcast %222 : vector<1x1xf32> to vector<2x1xf32>
    %299 = arith.addf %297, %298 : vector<2x1xf32>
    %300 = vector.broadcast %220 : vector<1x32xf32> to vector<2x32xf32>
    %301 = arith.mulf %218, %300 : vector<2x32xf32>
    %cst_52 = arith.constant dense<0.000000e+00> : vector<2xf32>
    %302 = vector.multi_reduction <add>, %301, %cst_52 [1] : vector<2x32xf32> to vector<2xf32>
    %303 = vector.shape_cast %302 : vector<2xf32> to vector<2x1xf32>
    %304 = vector.broadcast %221 : vector<1x32xf32> to vector<2x32xf32>
    %305 = arith.mulf %44, %304 : vector<2x32xf32>
    %cst_53 = arith.constant dense<0.000000e+00> : vector<2xf32>
    %306 = vector.multi_reduction <add>, %305, %cst_53 [1] : vector<2x32xf32> to vector<2xf32>
    %307 = vector.shape_cast %306 : vector<2xf32> to vector<2x1xf32>
    %308 = arith.addf %303, %307 : vector<2x1xf32>
    %309 = vector.broadcast %222 : vector<1x1xf32> to vector<2x1xf32>
    %310 = arith.addf %308, %309 : vector<2x1xf32>
    %311 = arith.maximumf %233, %244 : vector<2x1xf32>
    %312 = arith.maximumf %311, %255 : vector<2x1xf32>
    %313 = arith.maximumf %312, %266 : vector<2x1xf32>
    %314 = arith.maximumf %313, %277 : vector<2x1xf32>
    %315 = arith.maximumf %314, %288 : vector<2x1xf32>
    %316 = arith.maximumf %315, %299 : vector<2x1xf32>
    %317 = arith.maximumf %316, %310 : vector<2x1xf32>
    %318 = arith.subf %233, %317 : vector<2x1xf32>
    %319 = math.exp %318 : vector<2x1xf32>
    %320 = arith.subf %244, %317 : vector<2x1xf32>
    %321 = math.exp %320 : vector<2x1xf32>
    %322 = arith.subf %255, %317 : vector<2x1xf32>
    %323 = math.exp %322 : vector<2x1xf32>
    %324 = arith.subf %266, %317 : vector<2x1xf32>
    %325 = math.exp %324 : vector<2x1xf32>
    %326 = arith.subf %277, %317 : vector<2x1xf32>
    %327 = math.exp %326 : vector<2x1xf32>
    %328 = arith.subf %288, %317 : vector<2x1xf32>
    %329 = math.exp %328 : vector<2x1xf32>
    %330 = arith.subf %299, %317 : vector<2x1xf32>
    %331 = math.exp %330 : vector<2x1xf32>
    %332 = arith.subf %310, %317 : vector<2x1xf32>
    %333 = math.exp %332 : vector<2x1xf32>
    %334 = arith.addf %319, %321 : vector<2x1xf32>
    %335 = arith.addf %334, %323 : vector<2x1xf32>
    %336 = arith.addf %335, %325 : vector<2x1xf32>
    %337 = arith.addf %336, %327 : vector<2x1xf32>
    %338 = arith.addf %337, %329 : vector<2x1xf32>
    %339 = arith.addf %338, %331 : vector<2x1xf32>
    %340 = arith.addf %339, %333 : vector<2x1xf32>
    %341 = tpu.reciprocal %340 {approx = true} : vector<2x1xf32> -> vector<2x1xf32>
    %cst_54 = arith.constant 0.000000e+00 : f32
    %342 = vector.broadcast %cst_54 : f32 to vector<2x32xf32>
    %cst_55 = arith.constant 0.000000e+00 : f32
    %343 = vector.broadcast %cst_55 : f32 to vector<2x32xf32>
    %344 = arith.mulf %319, %341 : vector<2x1xf32>
    %c0_56 = arith.constant 0 : index
    %c0_57 = arith.constant 0 : index
    %345 = vector.load %arg13[%c0_56, %c0_57] : memref<2x8xf32, #tpu.memory_space<vmem>>, vector<2x1xf32>
    tpu.vector_store %arg13[%c0_56, %c0_57], %344 {strides = array<i32>} : memref<2x8xf32, #tpu.memory_space<vmem>>, vector<2x1xf32>,
    %346 = vector.broadcast %344 : vector<2x1xf32> to vector<2x32xf32>
    %347 = arith.mulf %346, %43 : vector<2x32xf32>
    %348 = arith.addf %342, %347 : vector<2x32xf32>
    %349 = vector.broadcast %344 : vector<2x1xf32> to vector<2x32xf32>
    %350 = arith.mulf %349, %219 : vector<2x32xf32>
    %351 = arith.addf %343, %350 : vector<2x32xf32>
    %352 = arith.mulf %321, %341 : vector<2x1xf32>
    %c0_58 = arith.constant 0 : index
    %c1 = arith.constant 1 : index
    %353 = vector.load %arg13[%c0_58, %c1] : memref<2x8xf32, #tpu.memory_space<vmem>>, vector<2x1xf32>
    tpu.vector_store %arg13[%c0_58, %c1], %352 {strides = array<i32>} : memref<2x8xf32, #tpu.memory_space<vmem>>, vector<2x1xf32>,
    %354 = vector.broadcast %352 : vector<2x1xf32> to vector<2x32xf32>
    %355 = arith.mulf %354, %68 : vector<2x32xf32>
    %356 = arith.addf %348, %355 : vector<2x32xf32>
    %357 = vector.broadcast %352 : vector<2x1xf32> to vector<2x32xf32>
    %358 = arith.mulf %357, %194 : vector<2x32xf32>
    %359 = arith.addf %351, %358 : vector<2x32xf32>
    %360 = arith.mulf %323, %341 : vector<2x1xf32>
    %c0_59 = arith.constant 0 : index
    %c2 = arith.constant 2 : index
    %361 = vector.load %arg13[%c0_59, %c2] : memref<2x8xf32, #tpu.memory_space<vmem>>, vector<2x1xf32>
    tpu.vector_store %arg13[%c0_59, %c2], %360 {strides = array<i32>} : memref<2x8xf32, #tpu.memory_space<vmem>>, vector<2x1xf32>,
    %362 = vector.broadcast %360 : vector<2x1xf32> to vector<2x32xf32>
    %363 = arith.mulf %362, %93 : vector<2x32xf32>
    %364 = arith.addf %356, %363 : vector<2x32xf32>
    %365 = vector.broadcast %360 : vector<2x1xf32> to vector<2x32xf32>
    %366 = arith.mulf %365, %169 : vector<2x32xf32>
    %367 = arith.addf %359, %366 : vector<2x32xf32>
    %368 = arith.mulf %325, %341 : vector<2x1xf32>
    %c0_60 = arith.constant 0 : index
    %c3 = arith.constant 3 : index
    %369 = vector.load %arg13[%c0_60, %c3] : memref<2x8xf32, #tpu.memory_space<vmem>>, vector<2x1xf32>
    tpu.vector_store %arg13[%c0_60, %c3], %368 {strides = array<i32>} : memref<2x8xf32, #tpu.memory_space<vmem>>, vector<2x1xf32>,
    %370 = vector.broadcast %368 : vector<2x1xf32> to vector<2x32xf32>
    %371 = arith.mulf %370, %118 : vector<2x32xf32>
    %372 = arith.addf %364, %371 : vector<2x32xf32>
    %373 = vector.broadcast %368 : vector<2x1xf32> to vector<2x32xf32>
    %374 = arith.mulf %373, %144 : vector<2x32xf32>
    %375 = arith.addf %367, %374 : vector<2x32xf32>
    %376 = arith.mulf %327, %341 : vector<2x1xf32>
    %c0_61 = arith.constant 0 : index
    %c4 = arith.constant 4 : index
    %377 = vector.load %arg13[%c0_61, %c4] : memref<2x8xf32, #tpu.memory_space<vmem>>, vector<2x1xf32>
    tpu.vector_store %arg13[%c0_61, %c4], %376 {strides = array<i32>} : memref<2x8xf32, #tpu.memory_space<vmem>>, vector<2x1xf32>,
    %378 = vector.broadcast %376 : vector<2x1xf32> to vector<2x32xf32>
    %379 = arith.mulf %378, %143 : vector<2x32xf32>
    %380 = arith.addf %372, %379 : vector<2x32xf32>
    %381 = vector.broadcast %376 : vector<2x1xf32> to vector<2x32xf32>
    %382 = arith.mulf %381, %119 : vector<2x32xf32>
    %383 = arith.addf %375, %382 : vector<2x32xf32>
    %384 = arith.mulf %329, %341 : vector<2x1xf32>
    %c0_62 = arith.constant 0 : index
    %c5 = arith.constant 5 : index
    %385 = vector.load %arg13[%c0_62, %c5] : memref<2x8xf32, #tpu.memory_space<vmem>>, vector<2x1xf32>
    tpu.vector_store %arg13[%c0_62, %c5], %384 {strides = array<i32>} : memref<2x8xf32, #tpu.memory_space<vmem>>, vector<2x1xf32>,
    %386 = vector.broadcast %384 : vector<2x1xf32> to vector<2x32xf32>
    %387 = arith.mulf %386, %168 : vector<2x32xf32>
    %388 = arith.addf %380, %387 : vector<2x32xf32>
    %389 = vector.broadcast %384 : vector<2x1xf32> to vector<2x32xf32>
    %390 = arith.mulf %389, %94 : vector<2x32xf32>
    %391 = arith.addf %383, %390 : vector<2x32xf32>
    %392 = arith.mulf %331, %341 : vector<2x1xf32>
    %c0_63 = arith.constant 0 : index
    %c6 = arith.constant 6 : index
    %393 = vector.load %arg13[%c0_63, %c6] : memref<2x8xf32, #tpu.memory_space<vmem>>, vector<2x1xf32>
    tpu.vector_store %arg13[%c0_63, %c6], %392 {strides = array<i32>} : memref<2x8xf32, #tpu.memory_space<vmem>>, vector<2x1xf32>,
    %394 = vector.broadcast %392 : vector<2x1xf32> to vector<2x32xf32>
    %395 = arith.mulf %394, %193 : vector<2x32xf32>
    %396 = arith.addf %388, %395 : vector<2x32xf32>
    %397 = vector.broadcast %392 : vector<2x1xf32> to vector<2x32xf32>
    %398 = arith.mulf %397, %69 : vector<2x32xf32>
    %399 = arith.addf %391, %398 : vector<2x32xf32>
    %400 = arith.mulf %333, %341 : vector<2x1xf32>
    %c0_64 = arith.constant 0 : index
    %c7 = arith.constant 7 : index
    %401 = vector.load %arg13[%c0_64, %c7] : memref<2x8xf32, #tpu.memory_space<vmem>>, vector<2x1xf32>
    tpu.vector_store %arg13[%c0_64, %c7], %400 {strides = array<i32>} : memref<2x8xf32, #tpu.memory_space<vmem>>, vector<2x1xf32>,
    %402 = vector.broadcast %400 : vector<2x1xf32> to vector<2x32xf32>
    %403 = arith.mulf %402, %218 : vector<2x32xf32>
    %404 = arith.addf %396, %403 : vector<2x32xf32>
    %405 = vector.broadcast %400 : vector<2x1xf32> to vector<2x32xf32>
    %406 = arith.mulf %405, %44 : vector<2x32xf32>
    %407 = arith.addf %399, %406 : vector<2x32xf32>
    %c0_65 = arith.constant 0 : index
    %c0_66 = arith.constant 0 : index
    %408 = vector.load %arg7[%c0_65, %c0_66] : memref<32x32xf32, #tpu.memory_space<vmem>>, vector<32x32xf32>
    %cst_67 = arith.constant dense<0.000000e+00> : vector<2x32xf32>
    %409 = tpu.matmul %404, %408, %cst_67 {dimension_numbers = #tpu.dot_dimension_numbers<[1], [0], [0], [1], [0, 0, 1, 1], [], []>} : vector<2x32xf32>, vector<32x32xf32>, vector<2x32xf32> -> vector<2x32xf32>
    %c0_68 = arith.constant 0 : index
    %c0_69 = arith.constant 0 : index
    %410 = vector.load %arg8[%c0_68, %c0_69] : memref<32x32xf32, #tpu.memory_space<vmem>>, vector<32x32xf32>
    %cst_70 = arith.constant dense<0.000000e+00> : vector<2x32xf32>
    %411 = tpu.matmul %407, %410, %cst_70 {dimension_numbers = #tpu.dot_dimension_numbers<[1], [0], [0], [1], [0, 0, 1, 1], [], []>} : vector<2x32xf32>, vector<32x32xf32>, vector<2x32xf32> -> vector<2x32xf32>
    %412 = arith.addf %409, %411 : vector<2x32xf32>
    %c0_71 = arith.constant 0 : index
    %c0_72 = arith.constant 0 : index
    %413 = vector.load %arg9[%c0_71, %c0_72] : memref<1x32xf32, #tpu.memory_space<vmem>>, vector<1x32xf32>
    %414 = vector.broadcast %413 : vector<1x32xf32> to vector<2x32xf32>
    %415 = arith.addf %412, %414 : vector<2x32xf32>
    %cst_73 = arith.constant 0.000000e+00 : f32
    %416 = vector.broadcast %cst_73 : f32 to vector<2x32xf32>
    %417 = arith.maximumf %415, %416 : vector<2x32xf32>
    %c0_74 = arith.constant 0 : index
    %c0_75 = arith.constant 0 : index
    %418 = vector.load %arg10[%c0_74, %c0_75] : memref<32x6xf32, #tpu.memory_space<vmem>>, vector<32x6xf32>
    %cst_76 = arith.constant dense<0.000000e+00> : vector<2x6xf32>
    %419 = tpu.matmul %417, %418, %cst_76 {dimension_numbers = #tpu.dot_dimension_numbers<[1], [0], [0], [1], [0, 0, 1, 1], [], []>} : vector<2x32xf32>, vector<32x6xf32>, vector<2x6xf32> -> vector<2x6xf32>
    %c0_77 = arith.constant 0 : index
    %c0_78 = arith.constant 0 : index
    %420 = vector.load %arg11[%c0_77, %c0_78] : memref<1x6xf32, #tpu.memory_space<vmem>>, vector<1x6xf32>
    %421 = vector.broadcast %420 : vector<1x6xf32> to vector<2x6xf32>
    %422 = arith.addf %419, %421 : vector<2x6xf32>
    %c0_79 = arith.constant 0 : index
    %c0_80 = arith.constant 0 : index
    %423 = vector.load %arg12[%c0_79, %c0_80] : memref<2x6xf32, #tpu.memory_space<vmem>>, vector<2x6xf32>
    tpu.vector_store %arg12[%c0_79, %c0_80], %422 {strides = array<i32>} : memref<2x6xf32, #tpu.memory_space<vmem>>, vector<2x6xf32>,
    return
  }
}

</mosaic_0001>

<llo_original>
// kernel: rnn_classifier_forward.1
$region0: #{rnn_classifier_forward.1}
  #allocation0 [shape = 'u32[]', space=smem, size = 0x4, offset = 0x4, fixed_abs, tag = 'smem constant byte address 0x4 - core index']
  #allocation1 [shape = 'u32[144,128]{1,0:T(1,128)}', space=vmem, size = 0x12000, scoped, tag = 'internal scratch']
  #allocation2 [shape = 'f32[1,1]{1,0:T(1,128)S(1)}', space=vmem, size = 0x200, scoped, tag = 'scoped memory for rnn_classifier_forward.1']
  %s0 = inlined_call_operand.vmem [shape: s32[16,2], index: 0, kind: input, shape index: {}]
  %s1 = inlined_call_operand.hbm [shape: f32[256,256], index: 1, kind: input, shape index: {}]
  %s2 = inlined_call_operand.vmem [shape: f32[64,256], index: 2, kind: input, shape index: {}]
  %s3 = inlined_call_operand.vmem [shape: f32[1,64], index: 3, kind: input, shape index: {}]
  %s4 = inlined_call_operand.vmem [shape: f32[1,32], index: 4, kind: input, shape index: {}]
  %s5 = inlined_call_operand.vmem [shape: f32[1,32], index: 5, kind: input, shape index: {}]
  %s6 = inlined_call_operand.<no memory space> [shape: f32[1,1], index: 6, kind: input, shape index: {}]
  %s7 = inlined_call_operand.vmem [shape: f32[32,32], index: 7, kind: input, shape index: {}]
  %s8 = inlined_call_operand.hbm [shape: f32[32,32], index: 8, kind: input, shape index: {}]
  %s9 = inlined_call_operand.hbm [shape: f32[1,32], index: 9, kind: input, shape index: {}]
  %s10 = inlined_call_operand.vmem [shape: f32[32,6], index: 10, kind: input, shape index: {}]
  %s11 = inlined_call_operand.hbm [shape: f32[1,6], index: 11, kind: input, shape index: {}]
  %s12 = inlined_call_operand.hbm [shape: f32[2,6], index: 12, kind: output, shape index: {0}]
  %s13 = inlined_call_operand.hbm [shape: f32[2,8], index: 13, kind: output, shape index: {1}]
  %14 = xla_tuple %s12, %s13
  %s15 = sld [smem:[#allocation0]]
  $region82: #{rnn_classifier_forward.1} parent=0
    _
  %s17 = ssub.s32 1, %s15
  %s18 = scalar_select 0, %s17, %s15
  %v19 = vstv %s6
  %20 = vst [vmem:[#allocation2] sm:$0x1] %v19
  $region1: #{rnn_classifier_forward.1} parent=0
    #allocation3 [shape = 'u8[262144]{0}', space=vmem, size = 0x40000, scoped, tag = 'input window, operand 1, single buffered']
    #allocation4 [shape = 's32[1]{0}', space=sflag, size = 0x4, scoped, tag = 'scoped memory for rnn_classifier_forward.1']
    #allocation5 [shape = 's32[1]{0}', space=sflag, size = 0x4, scoped, tag = 'scoped memory for rnn_classifier_forward.1']
    #allocation6 [shape = 'u8[16384]{0}', space=vmem, size = 0x4000, scoped, tag = 'input window, operand 8, single buffered']
    #allocation7 [shape = 's32[1]{0}', space=sflag, size = 0x4, scoped, tag = 'scoped memory for rnn_classifier_forward.1']
    #allocation8 [shape = 'u8[512]{0}', space=vmem, size = 0x400, scoped, tag = 'input window, operand 9, single buffered']
    #allocation9 [shape = 'u8[512]{0}', space=vmem, size = 0x400, scoped, tag = 'input window, operand 11, single buffered']
    #allocation10 [shape = 's32[1]{0}', space=sflag, size = 0x4, scoped, tag = 'scoped memory for rnn_classifier_forward.1']
    #allocation11 [shape = 'u8[1024]{0}', space=vmem, size = 0x400, scoped, tag = 'output window, operand 0, single buffered']
    #allocation12 [shape = 'u8[1024]{0}', space=vmem, size = 0x400, scoped, tag = 'output window, operand 1, single buffered']
    #allocation13 [shape = 's32[1]{0}', space=sflag, size = 0x4, scoped, tag = 'scoped memory for rnn_classifier_forward.1']
    %21 = vsyncpa [#allocation4], 0
    %22 = vsyncpa [#allocation7], 0
    %23 = vsyncpa [#allocation10], 0
    %24 = vsyncpa [#allocation5], 0
    %25 = vsyncpa [#allocation13], 0
    // Predicated region
    $region2: #{rnn_classifier_forward.1} parent=1 // pred_check
      _
    $region3: #{rnn_classifier_forward.1} parent=1 // pred_check_branch
      %27 = sbr.rel (0) target = $region5
    $region4: #{rnn_classifier_forward.1} parent=1 // pred_region
      _
    $region5: #{rnn_classifier_forward.1} parent=1 // pred_fallthru
      _
    // Predicated region
    $region6: #{rnn_classifier_forward.1} parent=1 // pred_check
      _
    $region7: #{rnn_classifier_forward.1} parent=1 // pred_check_branch
      %29 = sbr.rel (0) target = $region9
    $region8: #{rnn_classifier_forward.1} parent=1 // pred_region
      %s31 = ssub.s32 8192, 8192
      %32 = vsyncadd [#allocation4], %s31
      %s33 = sshll.u32 [#allocation3], 4
      %s34 = int_to_ptr.vmem [resolvable:$true] %s33
      %39 = dma.hbm_to_vmem [thread:$0]  %s1, 8192, %s34, [#allocation4], 256, 256, 16
    $region9: #{rnn_classifier_forward.1} parent=1 // pred_fallthru
      _
    // Predicated region
    $region10: #{rnn_classifier_forward.1} parent=1 // pred_check
      _
    $region11: #{rnn_classifier_forward.1} parent=1 // pred_check_branch
      %41 = sbr.rel (0) target = $region13
    $region12: #{rnn_classifier_forward.1} parent=1 // pred_region
      _
    $region13: #{rnn_classifier_forward.1} parent=1 // pred_fallthru
      _
    // Predicated region
    $region14: #{rnn_classifier_forward.1} parent=1 // pred_check
      _
    $region15: #{rnn_classifier_forward.1} parent=1 // pred_check_branch
      %43 = sbr.rel (0) target = $region17
    $region16: #{rnn_classifier_forward.1} parent=1 // pred_region
      _
    $region17: #{rnn_classifier_forward.1} parent=1 // pred_fallthru
      _
    // Predicated region
    $region18: #{rnn_classifier_forward.1} parent=1 // pred_check
      _
    $region19: #{rnn_classifier_forward.1} parent=1 // pred_check_branch
      %45 = sbr.rel (0) target = $region21
    $region20: #{rnn_classifier_forward.1} parent=1 // pred_region
      _
    $region21: #{rnn_classifier_forward.1} parent=1 // pred_fallthru
      _
    // Predicated region
    $region22: #{rnn_classifier_forward.1} parent=1 // pred_check
      _
    $region23: #{rnn_classifier_forward.1} parent=1 // pred_check_branch
      %47 = sbr.rel (0) target = $region25
    $region24: #{rnn_classifier_forward.1} parent=1 // pred_region
      _
    $region25: #{rnn_classifier_forward.1} parent=1 // pred_fallthru
      _
    // Predicated region
    $region26: #{rnn_classifier_forward.1} parent=1 // pred_check
      _
    $region27: #{rnn_classifier_forward.1} parent=1 // pred_check_branch
      %49 = sbr.rel (0) target = $region29
    $region28: #{rnn_classifier_forward.1} parent=1 // pred_region
      _
    $region29: #{rnn_classifier_forward.1} parent=1 // pred_fallthru
      _
    // Predicated region
    $region30: #{rnn_classifier_forward.1} parent=1 // pred_check
      _
    $region31: #{rnn_classifier_forward.1} parent=1 // pred_check_branch
      %51 = sbr.rel (0) target = $region33
    $region32: #{rnn_classifier_forward.1} parent=1 // pred_region
      _
    $region33: #{rnn_classifier_forward.1} parent=1 // pred_fallthru
      _
    // Predicated region
    $region34: #{rnn_classifier_forward.1} parent=1 // pred_check
      _
    $region35: #{rnn_classifier_forward.1} parent=1 // pred_check_branch
      %53 = sbr.rel (0) target = $region37
    $region36: #{rnn_classifier_forward.1} parent=1 // pred_region
      %s55 = ssub.s32 512, 512
      %56 = vsyncadd [#allocation7], %s55
      %s57 = sshll.u32 [#allocation6], 4
      %s58 = int_to_ptr.vmem [resolvable:$true] %s57
      %63 = dma.hbm_to_vmem [thread:$0]  %s8, 512, %s58, [#allocation7], 128, 128, 8
    $region37: #{rnn_classifier_forward.1} parent=1 // pred_fallthru
      _
    // Predicated region
    $region38: #{rnn_classifier_forward.1} parent=1 // pred_check
      _
    $region39: #{rnn_classifier_forward.1} parent=1 // pred_check_branch
      %65 = sbr.rel (0) target = $region41
    $region40: #{rnn_classifier_forward.1} parent=1 // pred_region
      %s67 = ssub.s32 16, 16
      %68 = vsyncadd [#allocation7], %s67
      %s70 = sshll.u32 [#allocation8], 4
      %s71 = int_to_ptr.vmem [resolvable:$true] %s70
      %73 = dma.hbm_to_vmem [thread:$0]  %s9, 16, %s71, [#allocation7]
    $region41: #{rnn_classifier_forward.1} parent=1 // pred_fallthru
      _
    // Predicated region
    $region42: #{rnn_classifier_forward.1} parent=1 // pred_check
      _
    $region43: #{rnn_classifier_forward.1} parent=1 // pred_check_branch
      %75 = sbr.rel (0) target = $region45
    $region44: #{rnn_classifier_forward.1} parent=1 // pred_region
      _
    $region45: #{rnn_classifier_forward.1} parent=1 // pred_fallthru
      _
    // Predicated region
    $region46: #{rnn_classifier_forward.1} parent=1 // pred_check
      _
    $region47: #{rnn_classifier_forward.1} parent=1 // pred_check_branch
      %77 = sbr.rel (0) target = $region49
    $region48: #{rnn_classifier_forward.1} parent=1 // pred_region
      %s79 = ssub.s32 16, 16
      %80 = vsyncadd [#allocation10], %s79
      %s82 = sshll.u32 [#allocation9], 4
      %s83 = int_to_ptr.vmem [resolvable:$true] %s82
      %85 = dma.hbm_to_vmem [thread:$0]  %s11, 16, %s83, [#allocation10]
    $region49: #{rnn_classifier_forward.1} parent=1 // pred_fallthru
      _
    // Predicated region
    $region50: #{rnn_classifier_forward.1} parent=1 // pred_check
      _
    $region51: #{rnn_classifier_forward.1} parent=1 // pred_check_branch
      %87 = sbr.rel (0) target = $region53
    $region52: #{rnn_classifier_forward.1} parent=1 // pred_region
      %88 = dma.done [#allocation4], 8192
    $region53: #{rnn_classifier_forward.1} parent=1 // pred_fallthru
      _
    // Predicated region
    $region54: #{rnn_classifier_forward.1} parent=1 // pred_check
      _
    $region55: #{rnn_classifier_forward.1} parent=1 // pred_check_branch
      %90 = sbr.rel (0) target = $region57
    $region56: #{rnn_classifier_forward.1} parent=1 // pred_region
      %91 = dma.done [#allocation7], 512
    $region57: #{rnn_classifier_forward.1} parent=1 // pred_fallthru
      _
    // Predicated region
    $region58: #{rnn_classifier_forward.1} parent=1 // pred_check
      _
    $region59: #{rnn_classifier_forward.1} parent=1 // pred_check_branch
      %93 = sbr.rel (0) target = $region61
    $region60: #{rnn_classifier_forward.1} parent=1 // pred_region
      %94 = dma.done [#allocation7], 16
    $region61: #{rnn_classifier_forward.1} parent=1 // pred_fallthru
      _
    // Predicated region
    $region62: #{rnn_classifier_forward.1} parent=1 // pred_check
      _
    $region63: #{rnn_classifier_forward.1} parent=1 // pred_check_branch
      %96 = sbr.rel (0) target = $region65
    $region64: #{rnn_classifier_forward.1} parent=1 // pred_region
      %97 = dma.done [#allocation10], 16
    $region65: #{rnn_classifier_forward.1} parent=1 // pred_fallthru
      _
    %v98 = vld [vmem:[%s0] sm:$0xff]
    %v99 = vld [vmem:[%s0 + $0x8] sm:$0xff]
    %v100 = vlaneseq
    %v101 = vand.u32 %v100, 127
    %v102 = vadd.s32 %v101, 128
    %103 = vset.pattern.permute.xlu0 0
    %104 = vperm.xlu0 %103, %v98
    %v105 = vpop.permute.xlu0 %104
    %106 = vset.pattern.permute.xlu0 0
    %107 = vperm.xlu0 %106, %v99
    %v108 = vpop.permute.xlu0 %107
    %vm109 = vcmp.eq.s32.totalorder %v101, %v105
    %vm110 = vcmp.eq.s32.totalorder %v102, %v105
    %vm111 = vcmp.eq.s32.totalorder %v101, %v108
    %vm112 = vcmp.eq.s32.totalorder %v102, %v108
    %v113 = vsel %vm109, 1, 0
    %v114 = vsel %vm110, 1, 0
    %v115 = vsel %vm111, 1, 0
    %v116 = vsel %vm112, 1, 0
    %v117 = vcvt.s32.f32 %v113
    %v118 = vcvt.s32.f32 %v114
    %v119 = vcvt.s32.f32 %v115
    %v120 = vcvt.s32.f32 %v116
    %121 = vset.pattern.permute.xlu0 1
    %122 = vperm.xlu0 %121, %v98
    %v123 = vpop.permute.xlu0 %122
    %124 = vset.pattern.permute.xlu0 1
    %125 = vperm.xlu0 %124, %v99
    %v126 = vpop.permute.xlu0 %125
    %vm127 = vcmp.eq.s32.totalorder %v101, %v123
    %vm128 = vcmp.eq.s32.totalorder %v102, %v123
    %vm129 = vcmp.eq.s32.totalorder %v101, %v126
    %vm130 = vcmp.eq.s32.totalorder %v102, %v126
    %v131 = vsel %vm127, 1, 0
    %v132 = vsel %vm128, 1, 0
    %v133 = vsel %vm129, 1, 0
    %v134 = vsel %vm130, 1, 0
    %v135 = vcvt.s32.f32 %v131
    %v136 = vcvt.s32.f32 %v132
    %v137 = vcvt.s32.f32 %v133
    %v138 = vcvt.s32.f32 %v134
    %v139 = vadd.f32 %v117, %v135
    %v140 = vadd.f32 %v118, %v136
    %v141 = vadd.f32 %v119, %v137
    %v142 = vadd.f32 %v120, %v138
    %v143 = vld [vmem:[#allocation3] sm:$0xff]
    %v144 = vld [vmem:[#allocation3 + $0x8] sm:$0xff]
    %v145 = vld [vmem:[#allocation3 + $0x10] sm:$0xff]
    %v146 = vld [vmem:[#allocation3 + $0x18] sm:$0xff]
    %v147 = vld [vmem:[#allocation3 + $0x20] sm:$0xff]
    %v148 = vld [vmem:[#allocation3 + $0x28] sm:$0xff]
    %v149 = vld [vmem:[#allocation3 + $0x30] sm:$0xff]
    %v150 = vld [vmem:[#allocation3 + $0x38] sm:$0xff]
    %v151 = vld [vmem:[#allocation3 + $0x40] sm:$0xff]
    %v152 = vld [vmem:[#allocation3 + $0x48] sm:$0xff]
    %v153 = vld [vmem:[#allocation3 + $0x50] sm:$0xff]
    %v154 = vld [vmem:[#allocation3 + $0x58] sm:$0xff]
    %v155 = vld [vmem:[#allocation3 + $0x60] sm:$0xff]
    %v156 = vld [vmem:[#allocation3 + $0x68] sm:$0xff]
    %v157 = vld [vmem:[#allocation3 + $0x70] sm:$0xff]
    %v158 = vld [vmem:[#allocation3 + $0x78] sm:$0xff]
    %v159 = vld [vmem:[#allocation3 + $0x80] sm:$0xff]
    %v160 = vld [vmem:[#allocation3 + $0x88] sm:$0xff]
    %v161 = vld [vmem:[#allocation3 + $0x90] sm:$0xff]
    %v162 = vld [vmem:[#allocation3 + $0x98] sm:$0xff]
    %v163 = vld [vmem:[#allocation3 + $0xa0] sm:$0xff]
    %v164 = vld [vmem:[#allocation3 + $0xa8] sm:$0xff]
    %v165 = vld [vmem:[#allocation3 + $0xb0] sm:$0xff]
    %v166 = vld [vmem:[#allocation3 + $0xb8] sm:$0xff]
    %v167 = vld [vmem:[#allocation3 + $0xc0] sm:$0xff]
    %v168 = vld [vmem:[#allocation3 + $0xc8] sm:$0xff]
    %v169 = vld [vmem:[#allocation3 + $0xd0] sm:$0xff]
    %v170 = vld [vmem:[#allocation3 + $0xd8] sm:$0xff]
    %v171 = vld [vmem:[#allocation3 + $0xe0] sm:$0xff]
    %v172 = vld [vmem:[#allocation3 + $0xe8] sm:$0xff]
    %v173 = vld [vmem:[#allocation3 + $0xf0] sm:$0xff]
    %v174 = vld [vmem:[#allocation3 + $0xf8] sm:$0xff]
    %v175 = vld [vmem:[#allocation3 + $0x100] sm:$0xff]
    %v176 = vld [vmem:[#allocation3 + $0x108] sm:$0xff]
    %v177 = vld [vmem:[#allocation3 + $0x110] sm:$0xff]
    %v178 = vld [vmem:[#allocation3 + $0x118] sm:$0xff]
    %v179 = vld [vmem:[#allocation3 + $0x120] sm:$0xff]
    %v180 = vld [vmem:[#allocation3 + $0x128] sm:$0xff]
    %v181 = vld [vmem:[#allocation3 + $0x130] sm:$0xff]
    %v182 = vld [vmem:[#allocation3 + $0x138] sm:$0xff]
    %v183 = vld [vmem:[#allocation3 + $0x140] sm:$0xff]
    %v184 = vld [vmem:[#allocation3 + $0x148] sm:$0xff]
    %v185 = vld [vmem:[#allocation3 + $0x150] sm:$0xff]
    %v186 = vld [vmem:[#allocation3 + $0x158] sm:$0xff]
    %v187 = vld [vmem:[#allocation3 + $0x160] sm:$0xff]
    %v188 = vld [vmem:[#allocation3 + $0x168] sm:$0xff]
    %v189 = vld [vmem:[#allocation3 + $0x170] sm:$0xff]
    %v190 = vld [vmem:[#allocation3 + $0x178] sm:$0xff]
    %v191 = vld [vmem:[#allocation3 + $0x180] sm:$0xff]
    %v192 = vld [vmem:[#allocation3 + $0x188] sm:$0xff]
    %v193 = vld [vmem:[#allocation3 + $0x190] sm:$0xff]
    %v194 = vld [vmem:[#allocation3 + $0x198] sm:$0xff]
    %v195 = vld [vmem:[#allocation3 + $0x1a0] sm:$0xff]
    %v196 = vld [vmem:[#allocation3 + $0x1a8] sm:$0xff]
    %v197 = vld [vmem:[#allocation3 + $0x1b0] sm:$0xff]
    %v198 = vld [vmem:[#allocation3 + $0x1b8] sm:$0xff]
    %v199 = vld [vmem:[#allocation3 + $0x1c0] sm:$0xff]
    %v200 = vld [vmem:[#allocation3 + $0x1c8] sm:$0xff]
    %v201 = vld [vmem:[#allocation3 + $0x1d0] sm:$0xff]
    %v202 = vld [vmem:[#allocation3 + $0x1d8] sm:$0xff]
    %v203 = vld [vmem:[#allocation3 + $0x1e0] sm:$0xff]
    %v204 = vld [vmem:[#allocation3 + $0x1e8] sm:$0xff]
    %v205 = vld [vmem:[#allocation3 + $0x1f0] sm:$0xff]
    %v206 = vld [vmem:[#allocation3 + $0x1f8] sm:$0xff]
    %207 = vmatprep.subr.mxu0 %v144
    %208 = vmatpush1.msra.mxu0 %v143
    %209 = vmatprep.subr.mxu0 %v146
    %210 = vmatpush1.msra.mxu0 %v145
    %211 = vmatprep.subr.mxu0 %v148
    %212 = vmatpush1.msra.mxu0 %v147
    %213 = vmatprep.subr.mxu0 %v150
    %214 = vmatpush1.msra.mxu0 %v149
    %215 = vmatprep.subr.mxu0 %v152
    %216 = vmatpush1.msra.mxu0 %v151
    %217 = vmatprep.subr.mxu0 %v154
    %218 = vmatpush1.msra.mxu0 %v153
    %219 = vmatprep.subr.mxu0 %v156
    %220 = vmatpush1.msra.mxu0 %v155
    %221 = vmatprep.subr.mxu0 %v158
    %222 = vmatpush1.msra.mxu0 %v157
    %223 = vmatprep.subr.mxu0 %v160
    %224 = vmatpush1.msra.mxu0 %v159
    %225 = vmatprep.subr.mxu0 %v162
    %226 = vmatpush1.msra.mxu0 %v161
    %227 = vmatprep.subr.mxu0 %v164
    %228 = vmatpush1.msra.mxu0 %v163
    %229 = vmatprep.subr.mxu0 %v166
    %230 = vmatpush1.msra.mxu0 %v165
    %231 = vmatprep.subr.mxu0 %v168
    %232 = vmatpush1.msra.mxu0 %v167
    %233 = vmatprep.subr.mxu0 %v170
    %234 = vmatpush1.msra.mxu0 %v169
    %235 = vmatprep.subr.mxu0 %v172
    %236 = vmatpush1.msra.mxu0 %v171
    %237 = vmatprep.subr.mxu0 %v174
    %238 = vmatpush1.msra.mxu0 %v173
    %239 = vmatprep.subr.mxu0 %v176
    %240 = vmatpush1.msra.mxu0 %v175
    %241 = vmatprep.subr.mxu0 %v178
    %242 = vmatpush1.msra.mxu0 %v177
    %243 = vmatprep.subr.mxu0 %v180
    %244 = vmatpush1.msra.mxu0 %v179
    %245 = vmatprep.subr.mxu0 %v182
    %246 = vmatpush1.msra.mxu0 %v181
    %247 = vmatprep.subr.mxu0 %v184
    %248 = vmatpush1.msra.mxu0 %v183
    %249 = vmatprep.subr.mxu0 %v186
    %250 = vmatpush1.msra.mxu0 %v185
    %251 = vmatprep.subr.mxu0 %v188
    %252 = vmatpush1.msra.mxu0 %v187
    %253 = vmatprep.subr.mxu0 %v190
    %254 = vmatpush1.msra.mxu0 %v189
    %255 = vmatprep.subr.mxu0 %v192
    %256 = vmatpush1.msra.mxu0 %v191
    %257 = vmatprep.subr.mxu0 %v194
    %258 = vmatpush1.msra.mxu0 %v193
    %259 = vmatprep.subr.mxu0 %v196
    %260 = vmatpush1.msra.mxu0 %v195
    %261 = vmatprep.subr.mxu0 %v198
    %262 = vmatpush1.msra.mxu0 %v197
    %263 = vmatprep.subr.mxu0 %v200
    %264 = vmatpush1.msra.mxu0 %v199
    %265 = vmatprep.subr.mxu0 %v202
    %266 = vmatpush1.msra.mxu0 %v201
    %267 = vmatprep.subr.mxu0 %v204
    %268 = vmatpush1.msra.mxu0 %v203
    %269 = vmatprep.subr.mxu0 %v206
    %270 = vmatpush1.msra.mxu0 %v205
    %271 = vmatprep.mubr.f32.mxu0 %v140
    %272 = vmatmul.mubr.f32.gmra.mrb[0].mxu0 %v139
    %v273 = vpop.f32.mrb[0].mxu0
    %v274 = vadd.f32 0.0, %v273
    %v275 = vpop.f32.mrb[0].mxu0
    %v276 = vadd.f32 0.0, %v275
    %277 = vmatprep.mubr.f32.mxu0 %v142
    %278 = vmatmul.mubr.f32.gmra.mrb[0].mxu0 %v141
    %v279 = vpop.f32.mrb[0].mxu0
    %v280 = vadd.f32 0.0, %v279
    %v281 = vpop.f32.mrb[0].mxu0
    %v282 = vadd.f32 0.0, %v281
    %283 = vdwg.mxu0
    %v284 = vld [vmem:[%s2] sm:$0xff]
    %v285 = vld [vmem:[%s2 + $0x8] sm:$0xff]
    %v286 = vld [vmem:[%s2 + $0x10] sm:$0xff]
    %v287 = vld [vmem:[%s2 + $0x18] sm:$0xff]
    %v288 = vld [vmem:[%s2 + $0x20] sm:$0xff]
    %v289 = vld [vmem:[%s2 + $0x28] sm:$0xff]
    %v290 = vld [vmem:[%s2 + $0x30] sm:$0xff]
    %v291 = vld [vmem:[%s2 + $0x38] sm:$0xff]
    %v292 = vld [vmem:[%s2 + $0x40] sm:$0xff]
    %v293 = vld [vmem:[%s2 + $0x48] sm:$0xff]
    %v294 = vld [vmem:[%s2 + $0x50] sm:$0xff]
    %v295 = vld [vmem:[%s2 + $0x58] sm:$0xff]
    %v296 = vld [vmem:[%s2 + $0x60] sm:$0xff]
    %v297 = vld [vmem:[%s2 + $0x68] sm:$0xff]
    %v298 = vld [vmem:[%s2 + $0x70] sm:$0xff]
    %v299 = vld [vmem:[%s2 + $0x78] sm:$0xff]
    %v300 = vld [vmem:[%s3] sm:$0x1]
    %v302 = vlaneseq
    %v303 = vshrl.u32 %v302, 7
    %v304 = vsub.s32 0, %v303
    %v305 = vrot.slane %v300, %v304
    %vm307 = vcmask 523264
    %v309 = vsel %vm307, 0.0, 0
    %311 = vmatprep.subr.mxu0 %v285
    %312 = vmatpush1.msra.mxu0 %v284
    %313 = vmatprep.subr.mxu0 %v287
    %314 = vmatpush1.msra.mxu0 %v286
    %315 = vmatprep.subr.mxu0 %v289
    %316 = vmatpush1.msra.mxu0 %v288
    %317 = vmatprep.subr.mxu0 %v291
    %318 = vmatpush1.msra.mxu0 %v290
    %319 = vmatprep.subr.mxu0 %v293
    %320 = vmatpush1.msra.mxu0 %v292
    %321 = vmatprep.subr.mxu0 %v295
    %322 = vmatpush1.msra.mxu0 %v294
    %323 = vmatprep.subr.mxu0 %v297
    %324 = vmatpush1.msra.mxu0 %v296
    %325 = vmatprep.subr.mxu0 %v299
    %326 = vmatpush1.msra.mxu0 %v298
    %327 = vmatprep.subr.mxu0 0.0
    %328 = vmatpush1.msra.mxu0 0.0
    %329 = vmatprep.subr.mxu0 0.0
    %330 = vmatpush1.msra.mxu0 0.0
    %331 = vmatprep.subr.mxu0 0.0
    %332 = vmatpush1.msra.mxu0 0.0
    %333 = vmatprep.subr.mxu0 0.0
    %334 = vmatpush1.msra.mxu0 0.0
    %335 = vmatprep.subr.mxu0 0.0
    %336 = vmatpush1.msra.mxu0 0.0
    %337 = vmatprep.subr.mxu0 0.0
    %338 = vmatpush1.msra.mxu0 0.0
    %339 = vmatprep.subr.mxu0 0.0
    %340 = vmatpush1.msra.mxu0 0.0
    %341 = vmatprep.subr.mxu0 0.0
    %342 = vmatpush1.msra.mxu0 0.0
    %343 = vmatprep.subr.mxu0 0.0
    %344 = vmatpush1.msra.mxu0 0.0
    %345 = vmatprep.subr.mxu0 0.0
    %346 = vmatpush1.msra.mxu0 0.0
    %347 = vmatprep.subr.mxu0 0.0
    %348 = vmatpush1.msra.mxu0 0.0
    %349 = vmatprep.subr.mxu0 0.0
    %350 = vmatpush1.msra.mxu0 0.0
    %351 = vmatprep.subr.mxu0 0.0
    %352 = vmatpush1.msra.mxu0 0.0
    %353 = vmatprep.subr.mxu0 0.0
    %354 = vmatpush1.msra.mxu0 0.0
    %355 = vmatprep.subr.mxu0 0.0
    %356 = vmatpush1.msra.mxu0 0.0
    %357 = vmatprep.subr.mxu0 0.0
    %358 = vmatpush1.msra.mxu0 0.0
    %359 = vmatprep.subr.mxu0 0.0
    %360 = vmatpush1.msra.mxu0 0.0
    %361 = vmatprep.subr.mxu0 0.0
    %362 = vmatpush1.msra.mxu0 0.0
    %363 = vmatprep.subr.mxu0 0.0
    %364 = vmatpush1.msra.mxu0 0.0
    %365 = vmatprep.subr.mxu0 0.0
    %366 = vmatpush1.msra.mxu0 0.0
    %367 = vmatprep.subr.mxu0 0.0
    %368 = vmatpush1.msra.mxu0 0.0
    %369 = vmatprep.subr.mxu0 0.0
    %370 = vmatpush1.msra.mxu0 0.0
    %371 = vmatprep.subr.mxu0 0.0
    %372 = vmatpush1.msra.mxu0 0.0
    %373 = vmatprep.subr.mxu0 0.0
    %374 = vmatpush1.msra.mxu0 0.0
    %375 = vmatprep.mubr.f32.mxu0 0.0
    %376 = vmatmul.mubr.f32.gmra.mrb[0].mxu0 %v309
    %v377 = vpop.f32.mrb[0].mxu0
    %v378 = vadd.f32 0.0, %v377
    %v379 = vpop.f32.mrb[0].mxu0
    %v380 = vadd.f32 0.0, %v379
    %381 = vdwg.mxu0
    %v382 = vadd.f32 %v274, %v378
    %v383 = vxor.u32 %v382, 2147483648
    %v384 = vmul.f32 %v383, 1.442695
    %v385 = vpow.pop %v384
    %v386 = vadd.f32 %v385, 1.0
    %v387 = vrcp.pop %v386
    %v388 = vmul.f32 1.0, %v387
    %v389 = vadd.f32 %v380, %v305
    %v390 = vmul.f32 %v388, %v389
    %v391 = vadd.f32 %v276, %v390
    %v392 = vtanh.pop %v391
    %v393 = vsub.f32 1.0, %v388
    %395 = vrot.lane.b32.xlu0 %v392, 64
    %v396 = vpop.permute.xlu0 %395
    %v398 = vmul.f32 %v393, %v396
    %v399 = vmul.f32 %v388, 0.0
    %v400 = vadd.f32 %v398, %v399
    %402 = vrot.lane.b32.xlu0 %v400, 64
    %v403 = vpop.permute.xlu0 %402
    %v404 = vsel %vm307, %v403, 0
    %406 = vmatprep.subr.mxu0 %v285
    %407 = vmatpush1.msra.mxu0 %v284
    %408 = vmatprep.subr.mxu0 %v287
    %409 = vmatpush1.msra.mxu0 %v286
    %410 = vmatprep.subr.mxu0 %v289
    %411 = vmatpush1.msra.mxu0 %v288
    %412 = vmatprep.subr.mxu0 %v291
    %413 = vmatpush1.msra.mxu0 %v290
    %414 = vmatprep.subr.mxu0 %v293
    %415 = vmatpush1.msra.mxu0 %v292
    %416 = vmatprep.subr.mxu0 %v295
    %417 = vmatpush1.msra.mxu0 %v294
    %418 = vmatprep.subr.mxu0 %v297
    %419 = vmatpush1.msra.mxu0 %v296
    %420 = vmatprep.subr.mxu0 %v299
    %421 = vmatpush1.msra.mxu0 %v298
    %422 = vmatprep.subr.mxu0 0.0
    %423 = vmatpush1.msra.mxu0 0.0
    %424 = vmatprep.subr.mxu0 0.0
    %425 = vmatpush1.msra.mxu0 0.0
    %426 = vmatprep.subr.mxu0 0.0
    %427 = vmatpush1.msra.mxu0 0.0
    %428 = vmatprep.subr.mxu0 0.0
    %429 = vmatpush1.msra.mxu0 0.0
    %430 = vmatprep.subr.mxu0 0.0
    %431 = vmatpush1.msra.mxu0 0.0
    %432 = vmatprep.subr.mxu0 0.0
    %433 = vmatpush1.msra.mxu0 0.0
    %434 = vmatprep.subr.mxu0 0.0
    %435 = vmatpush1.msra.mxu0 0.0
    %436 = vmatprep.subr.mxu0 0.0
    %437 = vmatpush1.msra.mxu0 0.0
    %438 = vmatprep.subr.mxu0 0.0
    %439 = vmatpush1.msra.mxu0 0.0
    %440 = vmatprep.subr.mxu0 0.0
    %441 = vmatpush1.msra.mxu0 0.0
    %442 = vmatprep.subr.mxu0 0.0
    %443 = vmatpush1.msra.mxu0 0.0
    %444 = vmatprep.subr.mxu0 0.0
    %445 = vmatpush1.msra.mxu0 0.0
    %446 = vmatprep.subr.mxu0 0.0
    %447 = vmatpush1.msra.mxu0 0.0
    %448 = vmatprep.subr.mxu0 0.0
    %449 = vmatpush1.msra.mxu0 0.0
    %450 = vmatprep.subr.mxu0 0.0
    %451 = vmatpush1.msra.mxu0 0.0
    %452 = vmatprep.subr.mxu0 0.0
    %453 = vmatpush1.msra.mxu0 0.0
    %454 = vmatprep.subr.mxu0 0.0
    %455 = vmatpush1.msra.mxu0 0.0
    %456 = vmatprep.subr.mxu0 0.0
    %457 = vmatpush1.msra.mxu0 0.0
    %458 = vmatprep.subr.mxu0 0.0
    %459 = vmatpush1.msra.mxu0 0.0
    %460 = vmatprep.subr.mxu0 0.0
    %461 = vmatpush1.msra.mxu0 0.0
    %462 = vmatprep.subr.mxu0 0.0
    %463 = vmatpush1.msra.mxu0 0.0
    %464 = vmatprep.subr.mxu0 0.0
    %465 = vmatpush1.msra.mxu0 0.0
    %466 = vmatprep.subr.mxu0 0.0
    %467 = vmatpush1.msra.mxu0 0.0
    %468 = vmatprep.subr.mxu0 0.0
    %469 = vmatpush1.msra.mxu0 0.0
    %470 = vmatprep.mubr.f32.mxu0 0.0
    %471 = vmatmul.mubr.f32.gmra.mrb[0].mxu0 %v404
    %v472 = vpop.f32.mrb[0].mxu0
    %v473 = vadd.f32 0.0, %v472
    %v474 = vpop.f32.mrb[0].mxu0
    %v475 = vadd.f32 0.0, %v474
    %476 = vdwg.mxu0
    %v478 = vrot.slane %v473, 6
    %v480 = vadd.f32 %v274, %v478
    %v481 = vxor.u32 %v480, 2147483648
    %v482 = vmul.f32 %v481, 1.442695
    %v483 = vpow.pop %v482
    %v484 = vadd.f32 %v483, 1.0
    %v485 = vrcp.pop %v484
    %v486 = vmul.f32 1.0, %v485
    %v487 = vadd.f32 %v475, %v305
    %v489 = vrot.slane %v487, 6
    %v491 = vmul.f32 %v486, %v489
    %v492 = vadd.f32 %v276, %v491
    %v493 = vtanh.pop %v492
    %v494 = vsub.f32 1.0, %v486
    %496 = vrot.lane.b32.xlu0 %v493, 64
    %v497 = vpop.permute.xlu0 %496
    %v499 = vmul.f32 %v494, %v497
    %v500 = vrot.slane %v400, 6
    %v502 = vmul.f32 %v486, %v500
    %v503 = vadd.f32 %v499, %v502
    %v505 = vrot.slane %v503, 2
    %506 = vrot.lane.b32.xlu0 %v505, 64
    %v507 = vpop.permute.xlu0 %506
    %v508 = vsel %vm307, %v507, 0
    %510 = vmatprep.subr.mxu0 %v285
    %511 = vmatpush1.msra.mxu0 %v284
    %512 = vmatprep.subr.mxu0 %v287
    %513 = vmatpush1.msra.mxu0 %v286
    %514 = vmatprep.subr.mxu0 %v289
    %515 = vmatpush1.msra.mxu0 %v288
    %516 = vmatprep.subr.mxu0 %v291
    %517 = vmatpush1.msra.mxu0 %v290
    %518 = vmatprep.subr.mxu0 %v293
    %519 = vmatpush1.msra.mxu0 %v292
    %520 = vmatprep.subr.mxu0 %v295
    %521 = vmatpush1.msra.mxu0 %v294
    %522 = vmatprep.subr.mxu0 %v297
    %523 = vmatpush1.msra.mxu0 %v296
    %524 = vmatprep.subr.mxu0 %v299
    %525 = vmatpush1.msra.mxu0 %v298
    %526 = vmatprep.subr.mxu0 0.0
    %527 = vmatpush1.msra.mxu0 0.0
    %528 = vmatprep.subr.mxu0 0.0
    %529 = vmatpush1.msra.mxu0 0.0
    %530 = vmatprep.subr.mxu0 0.0
    %531 = vmatpush1.msra.mxu0 0.0
    %532 = vmatprep.subr.mxu0 0.0
    %533 = vmatpush1.msra.mxu0 0.0
    %534 = vmatprep.subr.mxu0 0.0
    %535 = vmatpush1.msra.mxu0 0.0
    %536 = vmatprep.subr.mxu0 0.0
    %537 = vmatpush1.msra.mxu0 0.0
    %538 = vmatprep.subr.mxu0 0.0
    %539 = vmatpush1.msra.mxu0 0.0
    %540 = vmatprep.subr.mxu0 0.0
    %541 = vmatpush1.msra.mxu0 0.0
    %542 = vmatprep.subr.mxu0 0.0
    %543 = vmatpush1.msra.mxu0 0.0
    %544 = vmatprep.subr.mxu0 0.0
    %545 = vmatpush1.msra.mxu0 0.0
    %546 = vmatprep.subr.mxu0 0.0
    %547 = vmatpush1.msra.mxu0 0.0
    %548 = vmatprep.subr.mxu0 0.0
    %549 = vmatpush1.msra.mxu0 0.0
    %550 = vmatprep.subr.mxu0 0.0
    %551 = vmatpush1.msra.mxu0 0.0
    %552 = vmatprep.subr.mxu0 0.0
    %553 = vmatpush1.msra.mxu0 0.0
    %554 = vmatprep.subr.mxu0 0.0
    %555 = vmatpush1.msra.mxu0 0.0
    %556 = vmatprep.subr.mxu0 0.0
    %557 = vmatpush1.msra.mxu0 0.0
    %558 = vmatprep.subr.mxu0 0.0
    %559 = vmatpush1.msra.mxu0 0.0
    %560 = vmatprep.subr.mxu0 0.0
    %561 = vmatpush1.msra.mxu0 0.0
    %562 = vmatprep.subr.mxu0 0.0
    %563 = vmatpush1.msra.mxu0 0.0
    %564 = vmatprep.subr.mxu0 0.0
    %565 = vmatpush1.msra.mxu0 0.0
    %566 = vmatprep.subr.mxu0 0.0
    %567 = vmatpush1.msra.mxu0 0.0
    %568 = vmatprep.subr.mxu0 0.0
    %569 = vmatpush1.msra.mxu0 0.0
    %570 = vmatprep.subr.mxu0 0.0
    %571 = vmatpush1.msra.mxu0 0.0
    %572 = vmatprep.subr.mxu0 0.0
    %573 = vmatpush1.msra.mxu0 0.0
    %574 = vmatprep.mubr.f32.mxu0 0.0
    %575 = vmatmul.mubr.f32.gmra.mrb[0].mxu0 %v508
    %v576 = vpop.f32.mrb[0].mxu0
    %v577 = vadd.f32 0.0, %v576
    %v578 = vpop.f32.mrb[0].mxu0
    %v579 = vadd.f32 0.0, %v578
    %580 = vdwg.mxu0
    %v582 = vrot.slane %v577, 4
    %v584 = vadd.f32 %v274, %v582
    %v585 = vxor.u32 %v584, 2147483648
    %v586 = vmul.f32 %v585, 1.442695
    %v587 = vpow.pop %v586
    %v588 = vadd.f32 %v587, 1.0
    %v589 = vrcp.pop %v588
    %v590 = vmul.f32 1.0, %v589
    %v591 = vadd.f32 %v579, %v305
    %v593 = vrot.slane %v591, 4
    %v595 = vmul.f32 %v590, %v593
    %v596 = vadd.f32 %v276, %v595
    %v597 = vtanh.pop %v596
    %v598 = vsub.f32 1.0, %v590
    %600 = vrot.lane.b32.xlu0 %v597, 64
    %v601 = vpop.permute.xlu0 %600
    %v603 = vmul.f32 %v598, %v601
    %v604 = vrot.slane %v503, 6
    %v606 = vmul.f32 %v590, %v604
    %v607 = vadd.f32 %v603, %v606
    %v609 = vrot.slane %v607, 4
    %610 = vrot.lane.b32.xlu0 %v609, 64
    %v611 = vpop.permute.xlu0 %610
    %v612 = vsel %vm307, %v611, 0
    %614 = vmatprep.subr.mxu0 %v285
    %615 = vmatpush1.msra.mxu0 %v284
    %616 = vmatprep.subr.mxu0 %v287
    %617 = vmatpush1.msra.mxu0 %v286
    %618 = vmatprep.subr.mxu0 %v289
    %619 = vmatpush1.msra.mxu0 %v288
    %620 = vmatprep.subr.mxu0 %v291
    %621 = vmatpush1.msra.mxu0 %v290
    %622 = vmatprep.subr.mxu0 %v293
    %623 = vmatpush1.msra.mxu0 %v292
    %624 = vmatprep.subr.mxu0 %v295
    %625 = vmatpush1.msra.mxu0 %v294
    %626 = vmatprep.subr.mxu0 %v297
    %627 = vmatpush1.msra.mxu0 %v296
    %628 = vmatprep.subr.mxu0 %v299
    %629 = vmatpush1.msra.mxu0 %v298
    %630 = vmatprep.subr.mxu0 0.0
    %631 = vmatpush1.msra.mxu0 0.0
    %632 = vmatprep.subr.mxu0 0.0
    %633 = vmatpush1.msra.mxu0 0.0
    %634 = vmatprep.subr.mxu0 0.0
    %635 = vmatpush1.msra.mxu0 0.0
    %636 = vmatprep.subr.mxu0 0.0
    %637 = vmatpush1.msra.mxu0 0.0
    %638 = vmatprep.subr.mxu0 0.0
    %639 = vmatpush1.msra.mxu0 0.0
    %640 = vmatprep.subr.mxu0 0.0
    %641 = vmatpush1.msra.mxu0 0.0
    %642 = vmatprep.subr.mxu0 0.0
    %643 = vmatpush1.msra.mxu0 0.0
    %644 = vmatprep.subr.mxu0 0.0
    %645 = vmatpush1.msra.mxu0 0.0
    %646 = vmatprep.subr.mxu0 0.0
    %647 = vmatpush1.msra.mxu0 0.0
    %648 = vmatprep.subr.mxu0 0.0
    %649 = vmatpush1.msra.mxu0 0.0
    %650 = vmatprep.subr.mxu0 0.0
    %651 = vmatpush1.msra.mxu0 0.0
    %652 = vmatprep.subr.mxu0 0.0
    %653 = vmatpush1.msra.mxu0 0.0
    %654 = vmatprep.subr.mxu0 0.0
    %655 = vmatpush1.msra.mxu0 0.0
    %656 = vmatprep.subr.mxu0 0.0
    %657 = vmatpush1.msra.mxu0 0.0
    %658 = vmatprep.subr.mxu0 0.0
    %659 = vmatpush1.msra.mxu0 0.0
    %660 = vmatprep.subr.mxu0 0.0
    %661 = vmatpush1.msra.mxu0 0.0
    %662 = vmatprep.subr.mxu0 0.0
    %663 = vmatpush1.msra.mxu0 0.0
    %664 = vmatprep.subr.mxu0 0.0
    %665 = vmatpush1.msra.mxu0 0.0
    %666 = vmatprep.subr.mxu0 0.0
    %667 = vmatpush1.msra.mxu0 0.0
    %668 = vmatprep.subr.mxu0 0.0
    %669 = vmatpush1.msra.mxu0 0.0
    %670 = vmatprep.subr.mxu0 0.0
    %671 = vmatpush1.msra.mxu0 0.0
    %672 = vmatprep.subr.mxu0 0.0
    %673 = vmatpush1.msra.mxu0 0.0
    %674 = vmatprep.subr.mxu0 0.0
    %675 = vmatpush1.msra.mxu0 0.0
    %676 = vmatprep.subr.mxu0 0.0
    %677 = vmatpush1.msra.mxu0 0.0
    %678 = vmatprep.mubr.f32.mxu0 0.0
    %679 = vmatmul.mubr.f32.gmra.mrb[0].mxu0 %v612
    %v680 = vpop.f32.mrb[0].mxu0
    %v681 = vadd.f32 0.0, %v680
    %v682 = vpop.f32.mrb[0].mxu0
    %v683 = vadd.f32 0.0, %v682
    %684 = vdwg.mxu0
    %v686 = vrot.slane %v681, 2
    %v688 = vadd.f32 %v274, %v686
    %v689 = vxor.u32 %v688, 2147483648
    %v690 = vmul.f32 %v689, 1.442695
    %v691 = vpow.pop %v690
    %v692 = vadd.f32 %v691, 1.0
    %v693 = vrcp.pop %v692
    %v694 = vmul.f32 1.0, %v693
    %v695 = vadd.f32 %v683, %v305
    %v697 = vrot.slane %v695, 2
    %v699 = vmul.f32 %v694, %v697
    %v700 = vadd.f32 %v276, %v699
    %v701 = vtanh.pop %v700
    %v702 = vsub.f32 1.0, %v694
    %704 = vrot.lane.b32.xlu0 %v701, 64
    %v705 = vpop.permute.xlu0 %704
    %v707 = vmul.f32 %v702, %v705
    %v708 = vrot.slane %v607, 6
    %v710 = vmul.f32 %v694, %v708
    %v711 = vadd.f32 %v707, %v710
    %v713 = vrot.slane %v711, 6
    %714 = vrot.lane.b32.xlu0 %v713, 64
    %v715 = vpop.permute.xlu0 %714
    %v716 = vsel %vm307, %v715, 0
    %718 = vmatprep.subr.mxu0 %v285
    %719 = vmatpush1.msra.mxu0 %v284
    %720 = vmatprep.subr.mxu0 %v287
    %721 = vmatpush1.msra.mxu0 %v286
    %722 = vmatprep.subr.mxu0 %v289
    %723 = vmatpush1.msra.mxu0 %v288
    %724 = vmatprep.subr.mxu0 %v291
    %725 = vmatpush1.msra.mxu0 %v290
    %726 = vmatprep.subr.mxu0 %v293
    %727 = vmatpush1.msra.mxu0 %v292
    %728 = vmatprep.subr.mxu0 %v295
    %729 = vmatpush1.msra.mxu0 %v294
    %730 = vmatprep.subr.mxu0 %v297
    %731 = vmatpush1.msra.mxu0 %v296
    %732 = vmatprep.subr.mxu0 %v299
    %733 = vmatpush1.msra.mxu0 %v298
    %734 = vmatprep.subr.mxu0 0.0
    %735 = vmatpush1.msra.mxu0 0.0
    %736 = vmatprep.subr.mxu0 0.0
    %737 = vmatpush1.msra.mxu0 0.0
    %738 = vmatprep.subr.mxu0 0.0
    %739 = vmatpush1.msra.mxu0 0.0
    %740 = vmatprep.subr.mxu0 0.0
    %741 = vmatpush1.msra.mxu0 0.0
    %742 = vmatprep.subr.mxu0 0.0
    %743 = vmatpush1.msra.mxu0 0.0
    %744 = vmatprep.subr.mxu0 0.0
    %745 = vmatpush1.msra.mxu0 0.0
    %746 = vmatprep.subr.mxu0 0.0
    %747 = vmatpush1.msra.mxu0 0.0
    %748 = vmatprep.subr.mxu0 0.0
    %749 = vmatpush1.msra.mxu0 0.0
    %750 = vmatprep.subr.mxu0 0.0
    %751 = vmatpush1.msra.mxu0 0.0
    %752 = vmatprep.subr.mxu0 0.0
    %753 = vmatpush1.msra.mxu0 0.0
    %754 = vmatprep.subr.mxu0 0.0
    %755 = vmatpush1.msra.mxu0 0.0
    %756 = vmatprep.subr.mxu0 0.0
    %757 = vmatpush1.msra.mxu0 0.0
    %758 = vmatprep.subr.mxu0 0.0
    %759 = vmatpush1.msra.mxu0 0.0
    %760 = vmatprep.subr.mxu0 0.0
    %761 = vmatpush1.msra.mxu0 0.0
    %762 = vmatprep.subr.mxu0 0.0
    %763 = vmatpush1.msra.mxu0 0.0
    %764 = vmatprep.subr.mxu0 0.0
    %765 = vmatpush1.msra.mxu0 0.0
    %766 = vmatprep.subr.mxu0 0.0
    %767 = vmatpush1.msra.mxu0 0.0
    %768 = vmatprep.subr.mxu0 0.0
    %769 = vmatpush1.msra.mxu0 0.0
    %770 = vmatprep.subr.mxu0 0.0
    %771 = vmatpush1.msra.mxu0 0.0
    %772 = vmatprep.subr.mxu0 0.0
    %773 = vmatpush1.msra.mxu0 0.0
    %774 = vmatprep.subr.mxu0 0.0
    %775 = vmatpush1.msra.mxu0 0.0
    %776 = vmatprep.subr.mxu0 0.0
    %777 = vmatpush1.msra.mxu0 0.0
    %778 = vmatprep.subr.mxu0 0.0
    %779 = vmatpush1.msra.mxu0 0.0
    %780 = vmatprep.subr.mxu0 0.0
    %781 = vmatpush1.msra.mxu0 0.0
    %782 = vmatprep.mubr.f32.mxu0 0.0
    %783 = vmatmul.mubr.f32.gmra.mrb[0].mxu0 %v716
    %v784 = vpop.f32.mrb[0].mxu0
    %v785 = vadd.f32 0.0, %v784
    %v786 = vpop.f32.mrb[0].mxu0
    %v787 = vadd.f32 0.0, %v786
    %788 = vdwg.mxu0
    %v789 = vadd.f32 %v280, %v785
    %v790 = vxor.u32 %v789, 2147483648
    %v791 = vmul.f32 %v790, 1.442695
    %v792 = vpow.pop %v791
    %v793 = vadd.f32 %v792, 1.0
    %v794 = vrcp.pop %v793
    %v795 = vmul.f32 1.0, %v794
    %v796 = vadd.f32 %v787, %v305
    %v797 = vmul.f32 %v795, %v796
    %v798 = vadd.f32 %v282, %v797
    %v799 = vtanh.pop %v798
    %v800 = vsub.f32 1.0, %v795
    %802 = vrot.lane.b32.xlu0 %v799, 64
    %v803 = vpop.permute.xlu0 %802
    %v805 = vmul.f32 %v800, %v803
    %v807 = vmul.f32 %v795, %v713
    %v808 = vadd.f32 %v805, %v807
    %810 = vrot.lane.b32.xlu0 %v808, 64
    %v811 = vpop.permute.xlu0 %810
    %v812 = vsel %vm307, %v811, 0
    %814 = vmatprep.subr.mxu0 %v285
    %815 = vmatpush1.msra.mxu0 %v284
    %816 = vmatprep.subr.mxu0 %v287
    %817 = vmatpush1.msra.mxu0 %v286
    %818 = vmatprep.subr.mxu0 %v289
    %819 = vmatpush1.msra.mxu0 %v288
    %820 = vmatprep.subr.mxu0 %v291
    %821 = vmatpush1.msra.mxu0 %v290
    %822 = vmatprep.subr.mxu0 %v293
    %823 = vmatpush1.msra.mxu0 %v292
    %824 = vmatprep.subr.mxu0 %v295
    %825 = vmatpush1.msra.mxu0 %v294
    %826 = vmatprep.subr.mxu0 %v297
    %827 = vmatpush1.msra.mxu0 %v296
    %828 = vmatprep.subr.mxu0 %v299
    %829 = vmatpush1.msra.mxu0 %v298
    %830 = vmatprep.subr.mxu0 0.0
    %831 = vmatpush1.msra.mxu0 0.0
    %832 = vmatprep.subr.mxu0 0.0
    %833 = vmatpush1.msra.mxu0 0.0
    %834 = vmatprep.subr.mxu0 0.0
    %835 = vmatpush1.msra.mxu0 0.0
    %836 = vmatprep.subr.mxu0 0.0
    %837 = vmatpush1.msra.mxu0 0.0
    %838 = vmatprep.subr.mxu0 0.0
    %839 = vmatpush1.msra.mxu0 0.0
    %840 = vmatprep.subr.mxu0 0.0
    %841 = vmatpush1.msra.mxu0 0.0
    %842 = vmatprep.subr.mxu0 0.0
    %843 = vmatpush1.msra.mxu0 0.0
    %844 = vmatprep.subr.mxu0 0.0
    %845 = vmatpush1.msra.mxu0 0.0
    %846 = vmatprep.subr.mxu0 0.0
    %847 = vmatpush1.msra.mxu0 0.0
    %848 = vmatprep.subr.mxu0 0.0
    %849 = vmatpush1.msra.mxu0 0.0
    %850 = vmatprep.subr.mxu0 0.0
    %851 = vmatpush1.msra.mxu0 0.0
    %852 = vmatprep.subr.mxu0 0.0
    %853 = vmatpush1.msra.mxu0 0.0
    %854 = vmatprep.subr.mxu0 0.0
    %855 = vmatpush1.msra.mxu0 0.0
    %856 = vmatprep.subr.mxu0 0.0
    %857 = vmatpush1.msra.mxu0 0.0
    %858 = vmatprep.subr.mxu0 0.0
    %859 = vmatpush1.msra.mxu0 0.0
    %860 = vmatprep.subr.mxu0 0.0
    %861 = vmatpush1.msra.mxu0 0.0
    %862 = vmatprep.subr.mxu0 0.0
    %863 = vmatpush1.msra.mxu0 0.0
    %864 = vmatprep.subr.mxu0 0.0
    %865 = vmatpush1.msra.mxu0 0.0
    %866 = vmatprep.subr.mxu0 0.0
    %867 = vmatpush1.msra.mxu0 0.0
    %868 = vmatprep.subr.mxu0 0.0
    %869 = vmatpush1.msra.mxu0 0.0
    %870 = vmatprep.subr.mxu0 0.0
    %871 = vmatpush1.msra.mxu0 0.0
    %872 = vmatprep.subr.mxu0 0.0
    %873 = vmatpush1.msra.mxu0 0.0
    %874 = vmatprep.subr.mxu0 0.0
    %875 = vmatpush1.msra.mxu0 0.0
    %876 = vmatprep.subr.mxu0 0.0
    %877 = vmatpush1.msra.mxu0 0.0
    %878 = vmatprep.mubr.f32.mxu0 0.0
    %879 = vmatmul.mubr.f32.gmra.mrb[0].mxu0 %v812
    %v880 = vpop.f32.mrb[0].mxu0
    %v881 = vadd.f32 0.0, %v880
    %v882 = vpop.f32.mrb[0].mxu0
    %v883 = vadd.f32 0.0, %v882
    %884 = vdwg.mxu0
    %v886 = vrot.slane %v881, 6
    %v888 = vadd.f32 %v280, %v886
    %v889 = vxor.u32 %v888, 2147483648
    %v890 = vmul.f32 %v889, 1.442695
    %v891 = vpow.pop %v890
    %v892 = vadd.f32 %v891, 1.0
    %v893 = vrcp.pop %v892
    %v894 = vmul.f32 1.0, %v893
    %v895 = vadd.f32 %v883, %v305
    %v897 = vrot.slane %v895, 6
    %v899 = vmul.f32 %v894, %v897
    %v900 = vadd.f32 %v282, %v899
    %v901 = vtanh.pop %v900
    %v902 = vsub.f32 1.0, %v894
    %904 = vrot.lane.b32.xlu0 %v901, 64
    %v905 = vpop.permute.xlu0 %904
    %v907 = vmul.f32 %v902, %v905
    %v908 = vrot.slane %v808, 6
    %v910 = vmul.f32 %v894, %v908
    %v911 = vadd.f32 %v907, %v910
    %v913 = vrot.slane %v911, 2
    %914 = vrot.lane.b32.xlu0 %v913, 64
    %v915 = vpop.permute.xlu0 %914
    %v916 = vsel %vm307, %v915, 0
    %918 = vmatprep.subr.mxu0 %v285
    %919 = vmatpush1.msra.mxu0 %v284
    %920 = vmatprep.subr.mxu0 %v287
    %921 = vmatpush1.msra.mxu0 %v286
    %922 = vmatprep.subr.mxu0 %v289
    %923 = vmatpush1.msra.mxu0 %v288
    %924 = vmatprep.subr.mxu0 %v291
    %925 = vmatpush1.msra.mxu0 %v290
    %926 = vmatprep.subr.mxu0 %v293
    %927 = vmatpush1.msra.mxu0 %v292
    %928 = vmatprep.subr.mxu0 %v295
    %929 = vmatpush1.msra.mxu0 %v294
    %930 = vmatprep.subr.mxu0 %v297
    %931 = vmatpush1.msra.mxu0 %v296
    %932 = vmatprep.subr.mxu0 %v299
    %933 = vmatpush1.msra.mxu0 %v298
    %934 = vmatprep.subr.mxu0 0.0
    %935 = vmatpush1.msra.mxu0 0.0
    %936 = vmatprep.subr.mxu0 0.0
    %937 = vmatpush1.msra.mxu0 0.0
    %938 = vmatprep.subr.mxu0 0.0
    %939 = vmatpush1.msra.mxu0 0.0
    %940 = vmatprep.subr.mxu0 0.0
    %941 = vmatpush1.msra.mxu0 0.0
    %942 = vmatprep.subr.mxu0 0.0
    %943 = vmatpush1.msra.mxu0 0.0
    %944 = vmatprep.subr.mxu0 0.0
    %945 = vmatpush1.msra.mxu0 0.0
    %946 = vmatprep.subr.mxu0 0.0
    %947 = vmatpush1.msra.mxu0 0.0
    %948 = vmatprep.subr.mxu0 0.0
    %949 = vmatpush1.msra.mxu0 0.0
    %950 = vmatprep.subr.mxu0 0.0
    %951 = vmatpush1.msra.mxu0 0.0
    %952 = vmatprep.subr.mxu0 0.0
    %953 = vmatpush1.msra.mxu0 0.0
    %954 = vmatprep.subr.mxu0 0.0
    %955 = vmatpush1.msra.mxu0 0.0
    %956 = vmatprep.subr.mxu0 0.0
    %957 = vmatpush1.msra.mxu0 0.0
    %958 = vmatprep.subr.mxu0 0.0
    %959 = vmatpush1.msra.mxu0 0.0
    %960 = vmatprep.subr.mxu0 0.0
    %961 = vmatpush1.msra.mxu0 0.0
    %962 = vmatprep.subr.mxu0 0.0
    %963 = vmatpush1.msra.mxu0 0.0
    %964 = vmatprep.subr.mxu0 0.0
    %965 = vmatpush1.msra.mxu0 0.0
    %966 = vmatprep.subr.mxu0 0.0
    %967 = vmatpush1.msra.mxu0 0.0
    %968 = vmatprep.subr.mxu0 0.0
    %969 = vmatpush1.msra.mxu0 0.0
    %970 = vmatprep.subr.mxu0 0.0
    %971 = vmatpush1.msra.mxu0 0.0
    %972 = vmatprep.subr.mxu0 0.0
    %973 = vmatpush1.msra.mxu0 0.0
    %974 = vmatprep.subr.mxu0 0.0
    %975 = vmatpush1.msra.mxu0 0.0
    %976 = vmatprep.subr.mxu0 0.0
    %977 = vmatpush1.msra.mxu0 0.0
    %978 = vmatprep.subr.mxu0 0.0
    %979 = vmatpush1.msra.mxu0 0.0
    %980 = vmatprep.subr.mxu0 0.0
    %981 = vmatpush1.msra.mxu0 0.0
    %982 = vmatprep.mubr.f32.mxu0 0.0
    %983 = vmatmul.mubr.f32.gmra.mrb[0].mxu0 %v916
    %v984 = vpop.f32.mrb[0].mxu0
    %v985 = vadd.f32 0.0, %v984
    %v986 = vpop.f32.mrb[0].mxu0
    %v987 = vadd.f32 0.0, %v986
    %988 = vdwg.mxu0
    %v990 = vrot.slane %v985, 4
    %v992 = vadd.f32 %v280, %v990
    %v993 = vxor.u32 %v992, 2147483648
    %v994 = vmul.f32 %v993, 1.442695
    %v995 = vpow.pop %v994
    %v996 = vadd.f32 %v995, 1.0
    %v997 = vrcp.pop %v996
    %v998 = vmul.f32 1.0, %v997
    %v999 = vadd.f32 %v987, %v305
    %v1001 = vrot.slane %v999, 4
    %v1003 = vmul.f32 %v998, %v1001
    %v1004 = vadd.f32 %v282, %v1003
    %v1005 = vtanh.pop %v1004
    %v1006 = vsub.f32 1.0, %v998
    %1008 = vrot.lane.b32.xlu0 %v1005, 64
    %v1009 = vpop.permute.xlu0 %1008
    %v1011 = vmul.f32 %v1006, %v1009
    %v1012 = vrot.slane %v911, 6
    %v1014 = vmul.f32 %v998, %v1012
    %v1015 = vadd.f32 %v1011, %v1014
    %v1017 = vrot.slane %v1015, 4
    %1018 = vrot.lane.b32.xlu0 %v1017, 64
    %v1019 = vpop.permute.xlu0 %1018
    %v1020 = vsel %vm307, %v1019, 0
    %1022 = vmatprep.subr.mxu0 %v285
    %1023 = vmatpush1.msra.mxu0 %v284
    %1024 = vmatprep.subr.mxu0 %v287
    %1025 = vmatpush1.msra.mxu0 %v286
    %1026 = vmatprep.subr.mxu0 %v289
    %1027 = vmatpush1.msra.mxu0 %v288
    %1028 = vmatprep.subr.mxu0 %v291
    %1029 = vmatpush1.msra.mxu0 %v290
    %1030 = vmatprep.subr.mxu0 %v293
    %1031 = vmatpush1.msra.mxu0 %v292
    %1032 = vmatprep.subr.mxu0 %v295
    %1033 = vmatpush1.msra.mxu0 %v294
    %1034 = vmatprep.subr.mxu0 %v297
    %1035 = vmatpush1.msra.mxu0 %v296
    %1036 = vmatprep.subr.mxu0 %v299
    %1037 = vmatpush1.msra.mxu0 %v298
    %1038 = vmatprep.subr.mxu0 0.0
    %1039 = vmatpush1.msra.mxu0 0.0
    %1040 = vmatprep.subr.mxu0 0.0
    %1041 = vmatpush1.msra.mxu0 0.0
    %1042 = vmatprep.subr.mxu0 0.0
    %1043 = vmatpush1.msra.mxu0 0.0
    %1044 = vmatprep.subr.mxu0 0.0
    %1045 = vmatpush1.msra.mxu0 0.0
    %1046 = vmatprep.subr.mxu0 0.0
    %1047 = vmatpush1.msra.mxu0 0.0
    %1048 = vmatprep.subr.mxu0 0.0
    %1049 = vmatpush1.msra.mxu0 0.0
    %1050 = vmatprep.subr.mxu0 0.0
    %1051 = vmatpush1.msra.mxu0 0.0
    %1052 = vmatprep.subr.mxu0 0.0
    %1053 = vmatpush1.msra.mxu0 0.0
    %1054 = vmatprep.subr.mxu0 0.0
    %1055 = vmatpush1.msra.mxu0 0.0
    %1056 = vmatprep.subr.mxu0 0.0
    %1057 = vmatpush1.msra.mxu0 0.0
    %1058 = vmatprep.subr.mxu0 0.0
    %1059 = vmatpush1.msra.mxu0 0.0
    %1060 = vmatprep.subr.mxu0 0.0
    %1061 = vmatpush1.msra.mxu0 0.0
    %1062 = vmatprep.subr.mxu0 0.0
    %1063 = vmatpush1.msra.mxu0 0.0
    %1064 = vmatprep.subr.mxu0 0.0
    %1065 = vmatpush1.msra.mxu0 0.0
    %1066 = vmatprep.subr.mxu0 0.0
    %1067 = vmatpush1.msra.mxu0 0.0
    %1068 = vmatprep.subr.mxu0 0.0
    %1069 = vmatpush1.msra.mxu0 0.0
    %1070 = vmatprep.subr.mxu0 0.0
    %1071 = vmatpush1.msra.mxu0 0.0
    %1072 = vmatprep.subr.mxu0 0.0
    %1073 = vmatpush1.msra.mxu0 0.0
    %1074 = vmatprep.subr.mxu0 0.0
    %1075 = vmatpush1.msra.mxu0 0.0
    %1076 = vmatprep.subr.mxu0 0.0
    %1077 = vmatpush1.msra.mxu0 0.0
    %1078 = vmatprep.subr.mxu0 0.0
    %1079 = vmatpush1.msra.mxu0 0.0
    %1080 = vmatprep.subr.mxu0 0.0
    %1081 = vmatpush1.msra.mxu0 0.0
    %1082 = vmatprep.subr.mxu0 0.0
    %1083 = vmatpush1.msra.mxu0 0.0
    %1084 = vmatprep.subr.mxu0 0.0
    %1085 = vmatpush1.msra.mxu0 0.0
    %1086 = vmatprep.mubr.f32.mxu0 0.0
    %1087 = vmatmul.mubr.f32.gmra.mrb[0].mxu0 %v1020
    %v1088 = vpop.f32.mrb[0].mxu0
    %v1089 = vadd.f32 0.0, %v1088
    %v1090 = vpop.f32.mrb[0].mxu0
    %v1091 = vadd.f32 0.0, %v1090
    %1092 = vdwg.mxu0
    %v1094 = vrot.slane %v1089, 2
    %v1096 = vadd.f32 %v280, %v1094
    %v1097 = vxor.u32 %v1096, 2147483648
    %v1098 = vmul.f32 %v1097, 1.442695
    %v1099 = vpow.pop %v1098
    %v1100 = vadd.f32 %v1099, 1.0
    %v1101 = vrcp.pop %v1100
    %v1102 = vmul.f32 1.0, %v1101
    %v1103 = vadd.f32 %v1091, %v305
    %v1105 = vrot.slane %v1103, 2
    %v1107 = vmul.f32 %v1102, %v1105
    %v1108 = vadd.f32 %v282, %v1107
    %v1109 = vtanh.pop %v1108
    %v1110 = vsub.f32 1.0, %v1102
    %1112 = vrot.lane.b32.xlu0 %v1109, 64
    %v1113 = vpop.permute.xlu0 %1112
    %v1115 = vmul.f32 %v1110, %v1113
    %v1116 = vrot.slane %v1015, 6
    %v1118 = vmul.f32 %v1102, %v1116
    %v1119 = vadd.f32 %v1115, %v1118
    %v1120 = vld [vmem:[%s4] sm:$0x1]
    %v1121 = vld [vmem:[%s5] sm:$0x1]
    %v1122 = vld [vmem:[#allocation2] sm:$0x1]
    %v1124 = vlaneseq
    %v1125 = vshrl.u32 %v1124, 7
    %v1126 = vsub.s32 0, %v1125
    %v1127 = vrot.slane %v1120, %v1126
    %1128 = vrot.lane.b32.xlu0 %v1127, 64
    %v1129 = vpop.permute.xlu0 %1128
    %v1131 = vmul.f32 %v400, %v1129
    %1133 = vrot.lane.b32.xlu0 %v1131, 64
    %v1134 = vpop.permute.xlu0 %1133
    %vm1136 = vcmask 254976
    %v1137 = vsel %vm1136, %v1134, 0.0
    %1138 = vadd.xlane.f32.xlu0 %v1137
    %v1139 = vpop.xlane.xlu0 %1138
    %v1141 = vlaneseq
    %v1142 = vshrl.u32 %v1141, 7
    %v1143 = vsub.s32 0, %v1142
    %v1144 = vrot.slane %v1121, %v1143
    %1145 = vrot.lane.b32.xlu0 %v1144, 96
    %v1146 = vpop.permute.xlu0 %1145
    %v1148 = vmul.f32 %v1119, %v1146
    %1150 = vrot.lane.b32.xlu0 %v1148, 32
    %v1151 = vpop.permute.xlu0 %1150
    %vm1153 = vcmask 261126
    %v1154 = vsel %vm1153, %v1151, 0.0
    %1155 = vadd.xlane.f32.xlu0 %v1154
    %v1156 = vpop.xlane.xlu0 %1155
    %v1158 = vrot.slane %v1156, 6
    %v1160 = vadd.f32 %v1139, %v1158
    %v1162 = vlaneseq
    %v1163 = vshrl.u32 %v1162, 7
    %v1164 = vsub.s32 0, %v1163
    %v1165 = vrot.slane %v1122, %v1164
    %v1167 = vadd.f32 %v1160, %v1165
    %v1168 = vmul.f32 %v503, %v1129
    %1170 = vrot.lane.b32.xlu0 %v1168, 64
    %v1171 = vpop.permute.xlu0 %1170
    %vm1173 = vcmask 257026
    %v1174 = vsel %vm1173, %v1171, 0.0
    %1175 = vadd.xlane.f32.xlu0 %v1174
    %v1176 = vpop.xlane.xlu0 %1175
    %v1177 = vmul.f32 %v1015, %v1146
    %1179 = vrot.lane.b32.xlu0 %v1177, 32
    %v1180 = vpop.permute.xlu0 %1179
    %vm1182 = vcmask 259076
    %v1183 = vsel %vm1182, %v1180, 0.0
    %1184 = vadd.xlane.f32.xlu0 %v1183
    %v1185 = vpop.xlane.xlu0 %1184
    %v1187 = vrot.slane %v1185, 2
    %v1189 = vadd.f32 %v1176, %v1187
    %v1190 = vadd.f32 %v1189, %v1165
    %v1191 = vmul.f32 %v607, %v1129
    %1193 = vrot.lane.b32.xlu0 %v1191, 64
    %v1194 = vpop.permute.xlu0 %1193
    %v1196 = vsel %vm1182, %v1194, 0.0
    %1197 = vadd.xlane.f32.xlu0 %v1196
    %v1198 = vpop.xlane.xlu0 %1197
    %v1199 = vmul.f32 %v911, %v1146
    %1201 = vrot.lane.b32.xlu0 %v1199, 32
    %v1202 = vpop.permute.xlu0 %1201
    %v1204 = vsel %vm1173, %v1202, 0.0
    %1205 = vadd.xlane.f32.xlu0 %v1204
    %v1206 = vpop.xlane.xlu0 %1205
    %v1208 = vrot.slane %v1206, 6
    %v1210 = vadd.f32 %v1198, %v1208
    %v1211 = vadd.f32 %v1210, %v1165
    %v1212 = vmul.f32 %v711, %v1129
    %1214 = vrot.lane.b32.xlu0 %v1212, 64
    %v1215 = vpop.permute.xlu0 %1214
    %v1217 = vsel %vm1153, %v1215, 0.0
    %1218 = vadd.xlane.f32.xlu0 %v1217
    %v1219 = vpop.xlane.xlu0 %1218
    %v1220 = vmul.f32 %v808, %v1146
    %1222 = vrot.lane.b32.xlu0 %v1220, 32
    %v1223 = vpop.permute.xlu0 %1222
    %v1225 = vsel %vm1136, %v1223, 0.0
    %1226 = vadd.xlane.f32.xlu0 %v1225
    %v1227 = vpop.xlane.xlu0 %1226
    %v1229 = vrot.slane %v1227, 2
    %v1231 = vadd.f32 %v1219, %v1229
    %v1232 = vadd.f32 %v1231, %v1165
    %v1233 = vmul.f32 %v808, %v1129
    %1235 = vrot.lane.b32.xlu0 %v1233, 64
    %v1236 = vpop.permute.xlu0 %1235
    %v1238 = vsel %vm1136, %v1236, 0.0
    %1239 = vadd.xlane.f32.xlu0 %v1238
    %v1240 = vpop.xlane.xlu0 %1239
    %v1241 = vmul.f32 %v711, %v1146
    %1243 = vrot.lane.b32.xlu0 %v1241, 32
    %v1244 = vpop.permute.xlu0 %1243
    %v1246 = vsel %vm1153, %v1244, 0.0
    %1247 = vadd.xlane.f32.xlu0 %v1246
    %v1248 = vpop.xlane.xlu0 %1247
    %v1250 = vrot.slane %v1248, 6
    %v1252 = vadd.f32 %v1240, %v1250
    %v1253 = vadd.f32 %v1252, %v1165
    %v1254 = vmul.f32 %v911, %v1129
    %1256 = vrot.lane.b32.xlu0 %v1254, 64
    %v1257 = vpop.permute.xlu0 %1256
    %v1259 = vsel %vm1173, %v1257, 0.0
    %1260 = vadd.xlane.f32.xlu0 %v1259
    %v1261 = vpop.xlane.xlu0 %1260
    %v1262 = vmul.f32 %v607, %v1146
    %1264 = vrot.lane.b32.xlu0 %v1262, 32
    %v1265 = vpop.permute.xlu0 %1264
    %v1267 = vsel %vm1182, %v1265, 0.0
    %1268 = vadd.xlane.f32.xlu0 %v1267
    %v1269 = vpop.xlane.xlu0 %1268
    %v1271 = vrot.slane %v1269, 2
    %v1273 = vadd.f32 %v1261, %v1271
    %v1274 = vadd.f32 %v1273, %v1165
    %v1275 = vmul.f32 %v1015, %v1129
    %1277 = vrot.lane.b32.xlu0 %v1275, 64
    %v1278 = vpop.permute.xlu0 %1277
    %v1280 = vsel %vm1182, %v1278, 0.0
    %1281 = vadd.xlane.f32.xlu0 %v1280
    %v1282 = vpop.xlane.xlu0 %1281
    %v1283 = vmul.f32 %v503, %v1146
    %1285 = vrot.lane.b32.xlu0 %v1283, 32
    %v1286 = vpop.permute.xlu0 %1285
    %v1288 = vsel %vm1173, %v1286, 0.0
    %1289 = vadd.xlane.f32.xlu0 %v1288
    %v1290 = vpop.xlane.xlu0 %1289
    %v1292 = vrot.slane %v1290, 6
    %v1294 = vadd.f32 %v1282, %v1292
    %v1295 = vadd.f32 %v1294, %v1165
    %v1296 = vmul.f32 %v1119, %v1129
    %1298 = vrot.lane.b32.xlu0 %v1296, 64
    %v1299 = vpop.permute.xlu0 %1298
    %v1301 = vsel %vm1153, %v1299, 0.0
    %1302 = vadd.xlane.f32.xlu0 %v1301
    %v1303 = vpop.xlane.xlu0 %1302
    %v1304 = vmul.f32 %v400, %v1146
    %1306 = vrot.lane.b32.xlu0 %v1304, 32
    %v1307 = vpop.permute.xlu0 %1306
    %v1309 = vsel %vm1136, %v1307, 0.0
    %1310 = vadd.xlane.f32.xlu0 %v1309
    %v1311 = vpop.xlane.xlu0 %1310
    %v1313 = vrot.slane %v1311, 2
    %v1315 = vadd.f32 %v1303, %v1313
    %v1316 = vadd.f32 %v1315, %v1165
    %v1318 = vrot.slane %v1190, 2
    %v1320 = vmax.f32 %v1167, %v1318
    %v1322 = vrot.slane %v1211, 4
    %v1324 = vmax.f32 %v1320, %v1322
    %v1326 = vrot.slane %v1232, 6
    %v1328 = vmax.f32 %v1324, %v1326
    %v1329 = vmax.f32 %v1328, %v1253
    %v1331 = vrot.slane %v1274, 2
    %v1333 = vmax.f32 %v1329, %v1331
    %v1335 = vrot.slane %v1295, 4
    %v1337 = vmax.f32 %v1333, %v1335
    %v1339 = vrot.slane %v1316, 6
    %v1341 = vmax.f32 %v1337, %v1339
    %v1342 = vsub.f32 %v1167, %v1341
    %v1343 = vmul.f32 %v1342, 1.442695
    %v1344 = vpow.pop %v1343
    %v1346 = vrot.slane %v1341, 6
    %v1348 = vsub.f32 %v1190, %v1346
    %v1349 = vmul.f32 %v1348, 1.442695
    %v1350 = vpow.pop %v1349
    %v1351 = vrot.slane %v1341, 4
    %v1353 = vsub.f32 %v1211, %v1351
    %v1354 = vmul.f32 %v1353, 1.442695
    %v1355 = vpow.pop %v1354
    %v1356 = vrot.slane %v1341, 2
    %v1358 = vsub.f32 %v1232, %v1356
    %v1359 = vmul.f32 %v1358, 1.442695
    %v1360 = vpow.pop %v1359
    %v1361 = vsub.f32 %v1253, %v1341
    %v1362 = vmul.f32 %v1361, 1.442695
    %v1363 = vpow.pop %v1362
    %v1364 = vsub.f32 %v1274, %v1346
    %v1365 = vmul.f32 %v1364, 1.442695
    %v1366 = vpow.pop %v1365
    %v1367 = vsub.f32 %v1295, %v1351
    %v1368 = vmul.f32 %v1367, 1.442695
    %v1369 = vpow.pop %v1368
    %v1370 = vsub.f32 %v1316, %v1356
    %v1371 = vmul.f32 %v1370, 1.442695
    %v1372 = vpow.pop %v1371
    %v1374 = vrot.slane %v1350, 2
    %v1376 = vadd.f32 %v1344, %v1374
    %v1378 = vrot.slane %v1355, 4
    %v1380 = vadd.f32 %v1376, %v1378
    %v1382 = vrot.slane %v1360, 6
    %v1384 = vadd.f32 %v1380, %v1382
    %v1385 = vadd.f32 %v1384, %v1363
    %v1387 = vrot.slane %v1366, 2
    %v1389 = vadd.f32 %v1385, %v1387
    %v1391 = vrot.slane %v1369, 4
    %v1393 = vadd.f32 %v1389, %v1391
    %v1395 = vrot.slane %v1372, 6
    %v1397 = vadd.f32 %v1393, %v1395
    %v1398 = vrcp.pop %v1397
    %v1399 = vmul.f32 %v1344, %v1398
    %vm1400 = vcmask 1024
    %1401 = vst.msk [vmem:[#allocation12] sm:$0x3] %vm1400, %v1399
    %1403 = vset.pattern.permute.xlu0 0
    %1404 = vperm.xlu0 %1403, %v1399
    %v1405 = vpop.permute.xlu0 %1404
    %v1407 = vmul.f32 %v1405, %v400
    %v1408 = vadd.f32 %v1407, 0.0
    %v1410 = vrot.slane %v1119, 6
    %1411 = vrot.lane.b32.xlu0 %v1410, 32
    %v1412 = vpop.permute.xlu0 %1411
    %v1414 = vmul.f32 %v1405, %v1412
    %v1415 = vadd.f32 %v1414, 0.0
    %v1417 = vrot.slane %v1398, 6
    %v1419 = vmul.f32 %v1350, %v1417
    %1421 = vrot.lane.b32.xlu0 %v1419, 1
    %v1422 = vpop.permute.xlu0 %1421
    %vm1424 = vcmask 11274
    %1425 = vst.msk [vmem:[#allocation12 - $0x2] sm:$0xc] %vm1424, %v1422
    %1426 = vset.pattern.permute.xlu0 0
    %1427 = vperm.xlu0 %1426, %v1419
    %v1428 = vpop.permute.xlu0 %1427
    %v1430 = vmul.f32 %v1428, %v503
    %v1432 = vrot.slane %v1430, 2
    %v1434 = vadd.f32 %v1408, %v1432
    %v1435 = vrot.slane %v1015, 2
    %1436 = vrot.lane.b32.xlu0 %v1435, 32
    %v1437 = vpop.permute.xlu0 %1436
    %v1439 = vmul.f32 %v1428, %v1437
    %v1441 = vrot.slane %v1439, 2
    %v1443 = vadd.f32 %v1415, %v1441
    %v1444 = vrot.slane %v1398, 4
    %v1446 = vmul.f32 %v1355, %v1444
    %1448 = vrot.lane.b32.xlu0 %v1446, 2
    %v1449 = vpop.permute.xlu0 %1448
    %vm1451 = vcmask 21524
    %1452 = vst.msk [vmem:[#allocation12 - $0x4] sm:$0x30] %vm1451, %v1449
    %1453 = vset.pattern.permute.xlu0 0
    %1454 = vperm.xlu0 %1453, %v1446
    %v1455 = vpop.permute.xlu0 %1454
    %v1457 = vmul.f32 %v1455, %v607
    %v1459 = vrot.slane %v1457, 4
    %v1461 = vadd.f32 %v1434, %v1459
    %1462 = vrot.lane.b32.xlu0 %v1012, 32
    %v1463 = vpop.permute.xlu0 %1462
    %v1465 = vmul.f32 %v1455, %v1463
    %v1467 = vrot.slane %v1465, 4
    %v1469 = vadd.f32 %v1443, %v1467
    %v1470 = vrot.slane %v1398, 2
    %v1472 = vmul.f32 %v1360, %v1470
    %1474 = vrot.lane.b32.xlu0 %v1472, 3
    %v1475 = vpop.permute.xlu0 %1474
    %vm1477 = vcmask 31774
    %1478 = vst.msk [vmem:[#allocation12 - $0x6] sm:$0xc0] %vm1477, %v1475
    %1479 = vset.pattern.permute.xlu0 0
    %1480 = vperm.xlu0 %1479, %v1472
    %v1481 = vpop.permute.xlu0 %1480
    %v1483 = vmul.f32 %v1481, %v711
    %v1485 = vrot.slane %v1483, 6
    %v1487 = vadd.f32 %v1461, %v1485
    %v1488 = vrot.slane %v808, 2
    %1489 = vrot.lane.b32.xlu0 %v1488, 32
    %v1490 = vpop.permute.xlu0 %1489
    %v1492 = vmul.f32 %v1481, %v1490
    %v1494 = vrot.slane %v1492, 6
    %v1496 = vadd.f32 %v1469, %v1494
    %v1497 = vmul.f32 %v1363, %v1398
    %1499 = vrot.lane.b32.xlu0 %v1497, 4
    %v1500 = vpop.permute.xlu0 %1499
    %vm1502 = vcmask 33824
    %1503 = vst.msk [vmem:[#allocation12] sm:$0x3] %vm1502, %v1500
    %1504 = vset.pattern.permute.xlu0 0
    %1505 = vperm.xlu0 %1504, %v1497
    %v1506 = vpop.permute.xlu0 %1505
    %v1508 = vmul.f32 %v1506, %v808
    %v1509 = vadd.f32 %v1487, %v1508
    %1510 = vrot.lane.b32.xlu0 %v713, 32
    %v1511 = vpop.permute.xlu0 %1510
    %v1513 = vmul.f32 %v1506, %v1511
    %v1514 = vadd.f32 %v1496, %v1513
    %v1515 = vmul.f32 %v1366, %v1417
    %1517 = vrot.lane.b32.xlu0 %v1515, 5
    %v1518 = vpop.permute.xlu0 %1517
    %vm1520 = vcmask 44074
    %1521 = vst.msk [vmem:[#allocation12 - $0x2] sm:$0xc] %vm1520, %v1518
    %1522 = vset.pattern.permute.xlu0 0
    %1523 = vperm.xlu0 %1522, %v1515
    %v1524 = vpop.permute.xlu0 %1523
    %v1526 = vmul.f32 %v1524, %v911
    %v1528 = vrot.slane %v1526, 2
    %v1530 = vadd.f32 %v1509, %v1528
    %v1531 = vrot.slane %v607, 2
    %1532 = vrot.lane.b32.xlu0 %v1531, 32
    %v1533 = vpop.permute.xlu0 %1532
    %v1535 = vmul.f32 %v1524, %v1533
    %v1537 = vrot.slane %v1535, 2
    %v1539 = vadd.f32 %v1514, %v1537
    %v1540 = vmul.f32 %v1369, %v1444
    %1542 = vrot.lane.b32.xlu0 %v1540, 6
    %v1543 = vpop.permute.xlu0 %1542
    %vm1545 = vcmask 54324
    %1546 = vst.msk [vmem:[#allocation12 - $0x4] sm:$0x30] %vm1545, %v1543
    %1547 = vset.pattern.permute.xlu0 0
    %1548 = vperm.xlu0 %1547, %v1540
    %v1549 = vpop.permute.xlu0 %1548
    %v1551 = vmul.f32 %v1549, %v1015
    %v1553 = vrot.slane %v1551, 4
    %v1555 = vadd.f32 %v1530, %v1553
    %1556 = vrot.lane.b32.xlu0 %v604, 32
    %v1557 = vpop.permute.xlu0 %1556
    %v1559 = vmul.f32 %v1549, %v1557
    %v1561 = vrot.slane %v1559, 4
    %v1563 = vadd.f32 %v1539, %v1561
    %v1564 = vmul.f32 %v1372, %v1470
    %1566 = vrot.lane.b32.xlu0 %v1564, 7
    %v1567 = vpop.permute.xlu0 %1566
    %vm1569 = vcmask 64574
    %1570 = vst.msk [vmem:[#allocation12 - $0x6] sm:$0xc0] %vm1569, %v1567
    %1571 = vset.pattern.permute.xlu0 0
    %1572 = vperm.xlu0 %1571, %v1564
    %v1573 = vpop.permute.xlu0 %1572
    %v1575 = vmul.f32 %v1573, %v1119
    %v1577 = vrot.slane %v1575, 6
    %v1579 = vadd.f32 %v1555, %v1577
    %v1580 = vrot.slane %v400, 2
    %1581 = vrot.lane.b32.xlu0 %v1580, 32
    %v1582 = vpop.permute.xlu0 %1581
    %v1584 = vmul.f32 %v1573, %v1582
    %v1586 = vrot.slane %v1584, 6
    %v1588 = vadd.f32 %v1563, %v1586
    %v1589 = vld [vmem:[%s7] sm:$0xff]
    %v1590 = vld [vmem:[%s7 + $0x8] sm:$0xff]
    %v1591 = vld [vmem:[%s7 + $0x10] sm:$0xff]
    %v1592 = vld [vmem:[%s7 + $0x18] sm:$0xff]
    %v1593 = vld [vmem:[#allocation6] sm:$0xff]
    %v1594 = vld [vmem:[#allocation6 + $0x8] sm:$0xff]
    %v1595 = vld [vmem:[#allocation6 + $0x10] sm:$0xff]
    %v1596 = vld [vmem:[#allocation6 + $0x18] sm:$0xff]
    %vm1597 = vcmask 261120
    %v1599 = vsel %vm1597, %v1588, 0
    %1601 = vmatprep.subr.mxu0 0.0
    %1602 = vmatpush1.msra.mxu0 %v1593
    %1603 = vmatprep.subr.mxu0 0.0
    %1604 = vmatpush1.msra.mxu0 %v1594
    %1605 = vmatprep.subr.mxu0 0.0
    %1606 = vmatpush1.msra.mxu0 %v1595
    %1607 = vmatprep.subr.mxu0 0.0
    %1608 = vmatpush1.msra.mxu0 %v1596
    %1609 = vmatprep.subr.mxu0 0.0
    %1610 = vmatpush1.msra.mxu0 0.0
    %1611 = vmatprep.subr.mxu0 0.0
    %1612 = vmatpush1.msra.mxu0 0.0
    %1613 = vmatprep.subr.mxu0 0.0
    %1614 = vmatpush1.msra.mxu0 0.0
    %1615 = vmatprep.subr.mxu0 0.0
    %1616 = vmatpush1.msra.mxu0 0.0
    %1617 = vmatprep.subr.mxu0 0.0
    %1618 = vmatpush1.msra.mxu0 0.0
    %1619 = vmatprep.subr.mxu0 0.0
    %1620 = vmatpush1.msra.mxu0 0.0
    %1621 = vmatprep.subr.mxu0 0.0
    %1622 = vmatpush1.msra.mxu0 0.0
    %1623 = vmatprep.subr.mxu0 0.0
    %1624 = vmatpush1.msra.mxu0 0.0
    %1625 = vmatprep.subr.mxu0 0.0
    %1626 = vmatpush1.msra.mxu0 0.0
    %1627 = vmatprep.subr.mxu0 0.0
    %1628 = vmatpush1.msra.mxu0 0.0
    %1629 = vmatprep.subr.mxu0 0.0
    %1630 = vmatpush1.msra.mxu0 0.0
    %1631 = vmatprep.subr.mxu0 0.0
    %1632 = vmatpush1.msra.mxu0 0.0
    %1633 = vmatprep.subr.mxu0 0.0
    %1634 = vmatpush1.msra.mxu0 0.0
    %1635 = vmatprep.subr.mxu0 0.0
    %1636 = vmatpush1.msra.mxu0 0.0
    %1637 = vmatprep.subr.mxu0 0.0
    %1638 = vmatpush1.msra.mxu0 0.0
    %1639 = vmatprep.subr.mxu0 0.0
    %1640 = vmatpush1.msra.mxu0 0.0
    %1641 = vmatprep.subr.mxu0 0.0
    %1642 = vmatpush1.msra.mxu0 0.0
    %1643 = vmatprep.subr.mxu0 0.0
    %1644 = vmatpush1.msra.mxu0 0.0
    %1645 = vmatprep.subr.mxu0 0.0
    %1646 = vmatpush1.msra.mxu0 0.0
    %1647 = vmatprep.subr.mxu0 0.0
    %1648 = vmatpush1.msra.mxu0 0.0
    %1649 = vmatprep.subr.mxu0 0.0
    %1650 = vmatpush1.msra.mxu0 0.0
    %1651 = vmatprep.subr.mxu0 0.0
    %1652 = vmatpush1.msra.mxu0 0.0
    %1653 = vmatprep.subr.mxu0 0.0
    %1654 = vmatpush1.msra.mxu0 0.0
    %1655 = vmatprep.subr.mxu0 0.0
    %1656 = vmatpush1.msra.mxu0 0.0
    %1657 = vmatprep.subr.mxu0 0.0
    %1658 = vmatpush1.msra.mxu0 0.0
    %1659 = vmatprep.subr.mxu0 0.0
    %1660 = vmatpush1.msra.mxu0 0.0
    %1661 = vmatprep.subr.mxu0 0.0
    %1662 = vmatpush1.msra.mxu0 0.0
    %1663 = vmatprep.subr.mxu0 0.0
    %1664 = vmatpush1.msra.mxu0 0.0
    %1665 = vmatprep.mubr.f32.mxu0 0.0
    %1666 = vmatmul.mubr.f32.gmra.mrb[0].mxu0 %v1599
    %v1667 = vpop.f32.mrb[0].mxu0
    %v1668 = vadd.f32 0.0, %v1667
    %v1669 = vpop.f32.mrb[0].mxu0
    %1670 = vdwg.mxu0
    %1672 = vrot.lane.b32.xlu0 %v1579, 64
    %v1673 = vpop.permute.xlu0 %1672
    %v1674 = vsel %vm1597, %v1673, 0
    %1676 = vmatprep.subr.mxu0 0.0
    %1677 = vmatpush1.msra.mxu0 %v1589
    %1678 = vmatprep.subr.mxu0 0.0
    %1679 = vmatpush1.msra.mxu0 %v1590
    %1680 = vmatprep.subr.mxu0 0.0
    %1681 = vmatpush1.msra.mxu0 %v1591
    %1682 = vmatprep.subr.mxu0 0.0
    %1683 = vmatpush1.msra.mxu0 %v1592
    %1684 = vmatprep.subr.mxu0 0.0
    %1685 = vmatpush1.msra.mxu0 0.0
    %1686 = vmatprep.subr.mxu0 0.0
    %1687 = vmatpush1.msra.mxu0 0.0
    %1688 = vmatprep.subr.mxu0 0.0
    %1689 = vmatpush1.msra.mxu0 0.0
    %1690 = vmatprep.subr.mxu0 0.0
    %1691 = vmatpush1.msra.mxu0 0.0
    %1692 = vmatprep.subr.mxu0 0.0
    %1693 = vmatpush1.msra.mxu0 0.0
    %1694 = vmatprep.subr.mxu0 0.0
    %1695 = vmatpush1.msra.mxu0 0.0
    %1696 = vmatprep.subr.mxu0 0.0
    %1697 = vmatpush1.msra.mxu0 0.0
    %1698 = vmatprep.subr.mxu0 0.0
    %1699 = vmatpush1.msra.mxu0 0.0
    %1700 = vmatprep.subr.mxu0 0.0
    %1701 = vmatpush1.msra.mxu0 0.0
    %1702 = vmatprep.subr.mxu0 0.0
    %1703 = vmatpush1.msra.mxu0 0.0
    %1704 = vmatprep.subr.mxu0 0.0
    %1705 = vmatpush1.msra.mxu0 0.0
    %1706 = vmatprep.subr.mxu0 0.0
    %1707 = vmatpush1.msra.mxu0 0.0
    %1708 = vmatprep.subr.mxu0 0.0
    %1709 = vmatpush1.msra.mxu0 0.0
    %1710 = vmatprep.subr.mxu0 0.0
    %1711 = vmatpush1.msra.mxu0 0.0
    %1712 = vmatprep.subr.mxu0 0.0
    %1713 = vmatpush1.msra.mxu0 0.0
    %1714 = vmatprep.subr.mxu0 0.0
    %1715 = vmatpush1.msra.mxu0 0.0
    %1716 = vmatprep.subr.mxu0 0.0
    %1717 = vmatpush1.msra.mxu0 0.0
    %1718 = vmatprep.subr.mxu0 0.0
    %1719 = vmatpush1.msra.mxu0 0.0
    %1720 = vmatprep.subr.mxu0 0.0
    %1721 = vmatpush1.msra.mxu0 0.0
    %1722 = vmatprep.subr.mxu0 0.0
    %1723 = vmatpush1.msra.mxu0 0.0
    %1724 = vmatprep.subr.mxu0 0.0
    %1725 = vmatpush1.msra.mxu0 0.0
    %1726 = vmatprep.subr.mxu0 0.0
    %1727 = vmatpush1.msra.mxu0 0.0
    %1728 = vmatprep.subr.mxu0 0.0
    %1729 = vmatpush1.msra.mxu0 0.0
    %1730 = vmatprep.subr.mxu0 0.0
    %1731 = vmatpush1.msra.mxu0 0.0
    %1732 = vmatprep.subr.mxu0 0.0
    %1733 = vmatpush1.msra.mxu0 0.0
    %1734 = vmatprep.subr.mxu0 0.0
    %1735 = vmatpush1.msra.mxu0 0.0
    %1736 = vmatprep.subr.mxu0 0.0
    %1737 = vmatpush1.msra.mxu0 0.0
    %1738 = vmatprep.subr.mxu0 0.0
    %1739 = vmatpush1.msra.mxu0 0.0
    %1740 = vmatprep.mubr.f32.mxu0 0.0
    %1741 = vmatmul.mubr.f32.gmra.mrb[0].mxu0 %v1674
    %v1742 = vpop.f32.mrb[0].mxu0
    %v1743 = vadd.f32 %v1668, %v1742
    %v1744 = vpop.f32.mrb[0].mxu0
    %1745 = vdwg.mxu0
    %v1746 = vld [vmem:[#allocation8] sm:$0x1]
    %v1748 = vlaneseq
    %v1749 = vshrl.u32 %v1748, 7
    %v1750 = vsub.s32 0, %v1749
    %v1751 = vrot.slane %v1746, %v1750
    %v1753 = vadd.f32 %v1743, %v1751
    %v1754 = vmax.f32 %v1753, 0.0
    %v1755 = vld [vmem:[%s10] sm:$0xff]
    %v1756 = vld [vmem:[%s10 + $0x8] sm:$0xff]
    %v1757 = vld [vmem:[%s10 + $0x10] sm:$0xff]
    %v1758 = vld [vmem:[%s10 + $0x18] sm:$0xff]
    %v1759 = vld [vmem:[#allocation9] sm:$0x1]
    %v1761 = vlaneseq
    %v1762 = vshrl.u32 %v1761, 7
    %v1763 = vsub.s32 0, %v1762
    %v1764 = vrot.slane %v1759, %v1763
    %v1767 = vsel %vm1597, %v1754, 0
    %1769 = vmatprep.subr.mxu0 0.0
    %1770 = vmatpush1.msra.mxu0 %v1755
    %1771 = vmatprep.subr.mxu0 0.0
    %1772 = vmatpush1.msra.mxu0 %v1756
    %1773 = vmatprep.subr.mxu0 0.0
    %1774 = vmatpush1.msra.mxu0 %v1757
    %1775 = vmatprep.subr.mxu0 0.0
    %1776 = vmatpush1.msra.mxu0 %v1758
    %1777 = vmatprep.subr.mxu0 0.0
    %1778 = vmatpush1.msra.mxu0 0.0
    %1779 = vmatprep.subr.mxu0 0.0
    %1780 = vmatpush1.msra.mxu0 0.0
    %1781 = vmatprep.subr.mxu0 0.0
    %1782 = vmatpush1.msra.mxu0 0.0
    %1783 = vmatprep.subr.mxu0 0.0
    %1784 = vmatpush1.msra.mxu0 0.0
    %1785 = vmatprep.subr.mxu0 0.0
    %1786 = vmatpush1.msra.mxu0 0.0
    %1787 = vmatprep.subr.mxu0 0.0
    %1788 = vmatpush1.msra.mxu0 0.0
    %1789 = vmatprep.subr.mxu0 0.0
    %1790 = vmatpush1.msra.mxu0 0.0
    %1791 = vmatprep.subr.mxu0 0.0
    %1792 = vmatpush1.msra.mxu0 0.0
    %1793 = vmatprep.subr.mxu0 0.0
    %1794 = vmatpush1.msra.mxu0 0.0
    %1795 = vmatprep.subr.mxu0 0.0
    %1796 = vmatpush1.msra.mxu0 0.0
    %1797 = vmatprep.subr.mxu0 0.0
    %1798 = vmatpush1.msra.mxu0 0.0
    %1799 = vmatprep.subr.mxu0 0.0
    %1800 = vmatpush1.msra.mxu0 0.0
    %1801 = vmatprep.subr.mxu0 0.0
    %1802 = vmatpush1.msra.mxu0 0.0
    %1803 = vmatprep.subr.mxu0 0.0
    %1804 = vmatpush1.msra.mxu0 0.0
    %1805 = vmatprep.subr.mxu0 0.0
    %1806 = vmatpush1.msra.mxu0 0.0
    %1807 = vmatprep.subr.mxu0 0.0
    %1808 = vmatpush1.msra.mxu0 0.0
    %1809 = vmatprep.subr.mxu0 0.0
    %1810 = vmatpush1.msra.mxu0 0.0
    %1811 = vmatprep.subr.mxu0 0.0
    %1812 = vmatpush1.msra.mxu0 0.0
    %1813 = vmatprep.subr.mxu0 0.0
    %1814 = vmatpush1.msra.mxu0 0.0
    %1815 = vmatprep.subr.mxu0 0.0
    %1816 = vmatpush1.msra.mxu0 0.0
    %1817 = vmatprep.subr.mxu0 0.0
    %1818 = vmatpush1.msra.mxu0 0.0
    %1819 = vmatprep.subr.mxu0 0.0
    %1820 = vmatpush1.msra.mxu0 0.0
    %1821 = vmatprep.subr.mxu0 0.0
    %1822 = vmatpush1.msra.mxu0 0.0
    %1823 = vmatprep.subr.mxu0 0.0
    %1824 = vmatpush1.msra.mxu0 0.0
    %1825 = vmatprep.subr.mxu0 0.0
    %1826 = vmatpush1.msra.mxu0 0.0
    %1827 = vmatprep.subr.mxu0 0.0
    %1828 = vmatpush1.msra.mxu0 0.0
    %1829 = vmatprep.subr.mxu0 0.0
    %1830 = vmatpush1.msra.mxu0 0.0
    %1831 = vmatprep.subr.mxu0 0.0
    %1832 = vmatpush1.msra.mxu0 0.0
    %1833 = vmatprep.mubr.f32.mxu0 0.0
    %1834 = vmatmul.mubr.f32.gmra.mrb[0].mxu0 %v1767
    %v1835 = vpop.f32.mrb[0].mxu0
    %v1836 = vadd.f32 %v1764, %v1835
    %v1837 = vpop.f32.mrb[0].mxu0
    %1838 = vdwg.mxu0
    %vm1839 = vcmask 41984
    %1840 = vst.msk [vmem:[#allocation11] sm:$0x3] %vm1839, %v1836
    // Predicated region
    $region66: #{rnn_classifier_forward.1} parent=1 // pred_check
      _
    $region67: #{rnn_classifier_forward.1} parent=1 // pred_check_branch
      %1842 = sbr.rel (0) target = $region69
    $region68: #{rnn_classifier_forward.1} parent=1 // pred_region
      %s1844 = ssub.s32 32, 32
      %1845 = vsyncadd [#allocation5], %s1844
      %s1847 = sshll.u32 [#allocation11], 4
      %s1848 = int_to_ptr.vmem [resolvable:$true] %s1847
      %1850 = dma.vmem_to_hbm [thread:$0]  %s1848, 32, %s12, [#allocation5]
    $region69: #{rnn_classifier_forward.1} parent=1 // pred_fallthru
      _
    // Predicated region
    $region70: #{rnn_classifier_forward.1} parent=1 // pred_check
      _
    $region71: #{rnn_classifier_forward.1} parent=1 // pred_check_branch
      %1852 = sbr.rel (0) target = $region73
    $region72: #{rnn_classifier_forward.1} parent=1 // pred_region
      %s1854 = ssub.s32 32, 32
      %1855 = vsyncadd [#allocation13], %s1854
      %s1857 = sshll.u32 [#allocation12], 4
      %s1858 = int_to_ptr.vmem [resolvable:$true] %s1857
      %1860 = dma.vmem_to_hbm [thread:$0]  %s1858, 32, %s13, [#allocation13]
    $region73: #{rnn_classifier_forward.1} parent=1 // pred_fallthru
      _
    // Predicated region
    $region74: #{rnn_classifier_forward.1} parent=1 // pred_check
      _
    $region75: #{rnn_classifier_forward.1} parent=1 // pred_check_branch
      %1862 = sbr.rel (0) target = $region77
    $region76: #{rnn_classifier_forward.1} parent=1 // pred_region
      %1863 = dma.done [#allocation5], 32
    $region77: #{rnn_classifier_forward.1} parent=1 // pred_fallthru
      _
    // Predicated region
    $region78: #{rnn_classifier_forward.1} parent=1 // pred_check
      _
    $region79: #{rnn_classifier_forward.1} parent=1 // pred_check_branch
      %1865 = sbr.rel (0) target = $region81
    $region80: #{rnn_classifier_forward.1} parent=1 // pred_region
      %1866 = dma.done [#allocation13], 32
    $region81: #{rnn_classifier_forward.1} parent=1 // pred_fallthru
      _
    %1867 = vsyncpa [#allocation4], 1
    %1868 = vsyncpa [#allocation7], 1
    %1869 = vsyncpa [#allocation10], 1
    %1870 = vsyncpa [#allocation5], 1
    %1871 = vsyncpa [#allocation13], 1

</llo_original>
